<compile_context>
chip_gen: v5e
topology: v5e:2x2
jax: 0.10.0
libtpu: 0.0.40
codegen_flags: <defaults>
</compile_context>

<pallas_src>
import functools

import jax
import jax.numpy as jnp
from jax.experimental import pallas as pl
from jax.experimental.pallas import tpu as pltpu


_LANE = 128
_SUBLANE = 8
_VMEM_BUDGET = 48 * 1024 * 1024  # safe on v7x (64 MiB phys) and v5e/v6e (128 MiB)


def _round_up(n, m):
    return ((n + m - 1) // m) * m


def _nbytes(shape, itemsize=4):
    n = itemsize
    for s in shape:
        n *= int(s)
    return n


def proxy_nca_kernel(feats_ref, w_ref, b_ref, prox_ref, ts_ref, loss_ref, *,
                     nb_classes):
    """One batch tile of the ProxyNCA forward; batch sits on the lane axis.

    feats_ref: (2048, TB) f32  pooled backbone features (transposed)
    w_ref:     (Ep, 2048) f32  fc weight, torch (out, in) layout, zero-padded rows
    b_ref:     (Ep, 1)    f32  fc bias, zero-padded
    prox_ref:  (Cp, Ep)   f32  unit-normalized proxies, zero-padded
    ts_ref:    (1, TB)    i32  target class id per sample
    loss_ref:  (1, TB)    f32  per-sample ProxyNCA loss (lane-dense row)
    """
    # fc: x^T = W @ feats^T + b   (MXU, f32 accumulation).
    x = jnp.dot(w_ref[...], feats_ref[...],
                preferred_element_type=jnp.float32) + b_ref[...]          # (Ep, TB)

    # F.normalize(x, p=2, dim=1, eps=1e-12) == x * rsqrt(max(||x||^2, 1e-24)).
    xn = x * jax.lax.rsqrt(
        jnp.maximum(jnp.sum(x * x, axis=0, keepdims=True), 1e-24))

    # Proxies are pre-normalized, so ||p - x||^2 = 2 - 2 <p, x>.
    cross = jnp.dot(prox_ref[...], xn,
                    preferred_element_type=jnp.float32)                   # (Cp, TB)
    d = 2.0 - 2.0 * cross

    cls_ids = jax.lax.broadcasted_iota(jnp.int32, d.shape, 0)             # (Cp, TB)
    pos_mask = cls_ids == ts_ref[...]
    neg_mask = jnp.logical_and(cls_ids < nb_classes,
                               jnp.logical_not(pos_mask))

    d_pos = jnp.sum(jnp.where(pos_mask, d, 0.0), axis=0, keepdims=True)   # (1, TB)
    n_dist = jnp.sum(jnp.where(neg_mask, jnp.exp(-d), 0.0),
                     axis=0, keepdims=True)                               # (1, TB)
    # -log(exp(-d_pos) / n_dist), computed in the log domain.
    loss_ref[...] = d_pos + jnp.log(n_dist)


def proxy_nca_forward(xs, ts, fc_w, fc_b, proxies, *, tile_b=None):
    """ProxyNCA forward.

    xs:      (B, 2048, H, W) NCHW backbone feature maps.
    ts:      (B,) int targets.
    fc_w:    (sz_embed, 2048) fc weight (torch nn.Linear layout).
    fc_b:    (sz_embed,) fc bias.
    proxies: (nb_classes, sz_embed).
    Returns the scalar mean ProxyNCA loss.
    """
    B, c_feat, H, W = xs.shape
    nb_classes, sz_embed = proxies.shape
    assert fc_w.shape == (sz_embed, c_feat)
    assert nb_classes >= 2, "ProxyNCA needs at least one negative class"

    # GAP as a plain XLA reduce on the native NCHW layout (single HBM pass);
    # the tiny (B, 2048) -> (2048, B) transpose is negligible.
    feats_t = jnp.mean(xs.astype(jnp.float32), axis=(2, 3)).T             # (2048, B)

    # Zero-pad embedding/class dims; pre-normalize proxies (grid-invariant).
    e_pad = _round_up(sz_embed, _LANE)
    c_pad = _round_up(nb_classes, _SUBLANE)
    w_p = jnp.zeros((e_pad, c_feat), jnp.float32).at[:sz_embed, :].set(
        fc_w.astype(jnp.float32))
    b_p = jnp.zeros((e_pad, 1), jnp.float32).at[:sz_embed, 0].set(
        fc_b.astype(jnp.float32))
    prox_f32 = proxies.astype(jnp.float32)
    prox_n = prox_f32 * jax.lax.rsqrt(
        jnp.maximum(jnp.sum(prox_f32 * prox_f32, axis=1, keepdims=True), 1e-24))
    prox_p = jnp.zeros((c_pad, e_pad), jnp.float32).at[
        :nb_classes, :sz_embed].set(prox_n)
    ts_row = ts.reshape(1, B).astype(jnp.int32)

    # Batch tile on the lane axis: lane-aligned 128-wide tiles whenever B
    # allows a >=2-step grid (feeds both v7x TensorCores), else the full batch.
    if tile_b is None:
        tile_b = _LANE if (B % _LANE == 0 and B // _LANE >= 2) else B
    assert B % tile_b == 0 and (tile_b == B or tile_b % _LANE == 0), (
        f"tile_b={tile_b} must divide B={B} and be lane-aligned or the full batch")
    grid = (B // tile_b,)

    # VMEM budget: per-step blocks + grid-invariant operands (x2 for double
    # buffering) + headroom for in-kernel intermediates. Everything here is a
    # few MB, so it fits v7x's 64 MiB VMEM with large margin.
    # TODO(synk): for nb_classes in the many-thousands, tile the class axis
    # with an "arbitrary" grid dim and an online logsumexp for n_dist.
    block_bytes = (_nbytes((c_feat, tile_b)) + 2 * _nbytes((1, tile_b)))
    invariant_bytes = (_nbytes((e_pad, c_feat)) + _nbytes((e_pad, 1))
                       + _nbytes((c_pad, e_pad)))
    interm_bytes = 4 * (_nbytes((e_pad, tile_b)) + _nbytes((c_pad, tile_b)))
    vmem_needed = 2 * (block_bytes + invariant_bytes) + interm_bytes
    assert vmem_needed <= _VMEM_BUDGET, (
        f"VMEM estimate {vmem_needed} exceeds budget {_VMEM_BUDGET}; "
        f"reduce tile_b or tile the class axis")
    vmem_limit = min(_VMEM_BUDGET, max(vmem_needed + (4 << 20), 16 << 20))

    cost = pl.CostEstimate(
        flops=2 * B * c_feat * e_pad + 2 * B * e_pad * c_pad,
        transcendentals=B * c_pad + 2 * B,
        bytes_accessed=(_nbytes((c_feat, B)) + invariant_bytes
                        + 2 * _nbytes((1, B))),
    )

    kernel = functools.partial(proxy_nca_kernel, nb_classes=nb_classes)
    losses = pl.pallas_call(
        kernel,
        out_shape=jax.ShapeDtypeStruct((1, B), jnp.float32),
        grid_spec=pltpu.PrefetchScalarGridSpec(
            num_scalar_prefetch=0,
            grid=grid,
            in_specs=[
                pl.BlockSpec((c_feat, tile_b), lambda i: (0, i)),
                pl.BlockSpec((e_pad, c_feat), lambda i: (0, 0)),
                pl.BlockSpec((e_pad, 1), lambda i: (0, 0)),
                pl.BlockSpec((c_pad, e_pad), lambda i: (0, 0)),
                pl.BlockSpec((1, tile_b), lambda i: (0, i)),
            ],
            out_specs=pl.BlockSpec((1, tile_b), lambda i: (0, i)),
        ),
        compiler_params=pltpu.CompilerParams(
            dimension_semantics=("parallel",),
            vmem_limit_bytes=vmem_limit,
        ),
        cost_estimate=cost,
    )(feats_t, w_p, b_p, prox_p, ts_row)

    # Tiny final reduction kept outside so the batch grid stays "parallel".
    return jnp.mean(losses)


if __name__ == "__main__":
    key = jax.random.PRNGKey(0)
    # sz_batch=16; the fc input width is fixed at 2048 by the module, spatial
    # extent kept small.
    B, c_feat, H, W = 16, 2048, 2, 2
    sz_embed, nb_classes = 32, 16

    k1, k2, k3, k4 = jax.random.split(key, 4)
    xs = jax.random.normal(k1, (B, c_feat, H, W), jnp.float32)
    ts = jax.random.randint(k2, (B,), 0, nb_classes, dtype=jnp.int32)

    # fc = nn.Linear(2048, sz_embed), xavier_uniform weight, torch (out,in) layout.
    bound_fc = (6.0 / (c_feat + sz_embed)) ** 0.5
    fc_w = jax.random.uniform(k3, (sz_embed, c_feat), jnp.float32,
                              -bound_fc, bound_fc)
    fc_b = jnp.zeros((sz_embed,), jnp.float32)

    # proxies = Parameter(randn(nb_classes, sz_embed)) then xavier_uniform.
    bound_px = (6.0 / (nb_classes + sz_embed)) ** 0.5
    proxies = jax.random.uniform(k4, (nb_classes, sz_embed), jnp.float32,
                                 -bound_px, bound_px)

    fwd = jax.jit(proxy_nca_forward)
    loss = fwd(xs, ts, fc_w, fc_b, proxies)
    jax.block_until_ready(loss)
    print("KERNEL_OK")
</pallas_src>

<mosaic_0001>
module attributes {stable_mosaic.version = 11 : i64} {
  func.func @proxy_nca_kernel(%arg0: i32, %arg1: memref<2048x16xf32, #tpu.memory_space<vmem>>, %arg2: memref<128x2048xf32, #tpu.memory_space<vmem>>, %arg3: memref<128x1xf32, #tpu.memory_space<vmem>>, %arg4: memref<16x128xf32, #tpu.memory_space<vmem>>, %arg5: memref<1x16xi32, #tpu.memory_space<vmem>>, %arg6: memref<1x16xf32, #tpu.memory_space<vmem>>) attributes {dimension_semantics = [#tpu.dimension_semantics<parallel>], iteration_bounds = array<i64: 1>, scalar_prefetch = 0 : i64, scratch_operands = 0 : i64, tpu.core_type = #tpu.core_type<tc>, window_params = [{transform_indices = @transform_0, window_bounds = array<i64: 2048, 16>}, {pipeline_mode = #tpu.pipeline_mode<synchronous>, transform_indices = @transform_1, window_bounds = array<i64: 128, 2048>}, {pipeline_mode = #tpu.pipeline_mode<synchronous>, transform_indices = @transform_2, window_bounds = array<i64: 128, 1>}, {pipeline_mode = #tpu.pipeline_mode<synchronous>, transform_indices = @transform_3, window_bounds = array<i64: 16, 128>}, {transform_indices = @transform_4, window_bounds = array<i64: 1, 16>}, {transform_indices = @transform_5, window_bounds = array<i64: 1, 16>}]} {
    %c0 = arith.constant 0 : index
    %c0_0 = arith.constant 0 : index
    %0 = vector.load %arg2[%c0, %c0_0] : memref<128x2048xf32, #tpu.memory_space<vmem>>, vector<128x2048xf32>
    %c0_1 = arith.constant 0 : index
    %c0_2 = arith.constant 0 : index
    %1 = vector.load %arg1[%c0_1, %c0_2] : memref<2048x16xf32, #tpu.memory_space<vmem>>, vector<2048x16xf32>
    %cst = arith.constant dense<0.000000e+00> : vector<128x16xf32>
    %2 = tpu.matmul %0, %1, %cst {dimension_numbers = #tpu.dot_dimension_numbers<[1], [0], [0], [1], [0, 0, 1, 1], [], []>} : vector<128x2048xf32>, vector<2048x16xf32>, vector<128x16xf32> -> vector<128x16xf32>
    %c0_3 = arith.constant 0 : index
    %c0_4 = arith.constant 0 : index
    %3 = vector.load %arg3[%c0_3, %c0_4] : memref<128x1xf32, #tpu.memory_space<vmem>>, vector<128x1xf32>
    %4 = vector.broadcast %3 : vector<128x1xf32> to vector<128x16xf32>
    %5 = arith.addf %2, %4 : vector<128x16xf32>
    %6 = arith.mulf %5, %5 : vector<128x16xf32>
    %cst_5 = arith.constant dense<0.000000e+00> : vector<16xf32>
    %7 = vector.multi_reduction <add>, %6, %cst_5 [0] : vector<128x16xf32> to vector<16xf32>
    %8 = vector.shape_cast %7 : vector<16xf32> to vector<1x16xf32>
    %cst_6 = arith.constant 1.000000e-24 : f32
    %9 = vector.broadcast %cst_6 : f32 to vector<1x16xf32>
    %10 = arith.maximumf %8, %9 : vector<1x16xf32>
    %11 = math.rsqrt %10 : vector<1x16xf32>
    %12 = vector.broadcast %11 : vector<1x16xf32> to vector<128x16xf32>
    %13 = arith.mulf %5, %12 : vector<128x16xf32>
    %c0_7 = arith.constant 0 : index
    %c0_8 = arith.constant 0 : index
    %14 = vector.load %arg4[%c0_7, %c0_8] : memref<16x128xf32, #tpu.memory_space<vmem>>, vector<16x128xf32>
    %cst_9 = arith.constant dense<0.000000e+00> : vector<16x16xf32>
    %15 = tpu.matmul %14, %13, %cst_9 {dimension_numbers = #tpu.dot_dimension_numbers<[1], [0], [0], [1], [0, 0, 1, 1], [], []>} : vector<16x128xf32>, vector<128x16xf32>, vector<16x16xf32> -> vector<16x16xf32>
    %cst_10 = arith.constant 2.000000e+00 : f32
    %16 = vector.broadcast %cst_10 : f32 to vector<16x16xf32>
    %17 = arith.mulf %16, %15 : vector<16x16xf32>
    %cst_11 = arith.constant 2.000000e+00 : f32
    %18 = vector.broadcast %cst_11 : f32 to vector<16x16xf32>
    %19 = arith.subf %18, %17 : vector<16x16xf32>
    %20 = tpu.iota {dimensions = array<i32: 0>} : vector<16x16xi32>
    %c0_12 = arith.constant 0 : index
    %c0_13 = arith.constant 0 : index
    %21 = vector.load %arg5[%c0_12, %c0_13] : memref<1x16xi32, #tpu.memory_space<vmem>>, vector<1x16xi32>
    %22 = vector.broadcast %21 : vector<1x16xi32> to vector<16x16xi32>
    %23 = arith.cmpi eq, %20, %22 : vector<16x16xi32>
    %c16_i32 = arith.constant 16 : i32
    %24 = vector.broadcast %c16_i32 : i32 to vector<16x16xi32>
    %25 = arith.cmpi slt, %20, %24 : vector<16x16xi32>
    %cst_14 = arith.constant dense<true> : vector<16x16xi1>
    %26 = arith.xori %23, %cst_14 : vector<16x16xi1>
    %27 = arith.andi %25, %26 : vector<16x16xi1>
    %cst_15 = arith.constant 0.000000e+00 : f32
    %28 = vector.broadcast %cst_15 : f32 to vector<16x16xf32>
    %29 = arith.select %23, %19, %28 : vector<16x16xi1>, vector<16x16xf32>
    %cst_16 = arith.constant dense<0.000000e+00> : vector<16xf32>
    %30 = vector.multi_reduction <add>, %29, %cst_16 [0] : vector<16x16xf32> to vector<16xf32>
    %31 = vector.shape_cast %30 : vector<16xf32> to vector<1x16xf32>
    %cst_17 = arith.constant 0.000000e+00 : f32
    %32 = vector.broadcast %cst_17 : f32 to vector<16x16xf32>
    %33 = arith.subf %32, %19 : vector<16x16xf32>
    %34 = math.exp %33 : vector<16x16xf32>
    %cst_18 = arith.constant 0.000000e+00 : f32
    %35 = vector.broadcast %cst_18 : f32 to vector<16x16xf32>
    %36 = arith.select %27, %34, %35 : vector<16x16xi1>, vector<16x16xf32>
    %cst_19 = arith.constant dense<0.000000e+00> : vector<16xf32>
    %37 = vector.multi_reduction <add>, %36, %cst_19 [0] : vector<16x16xf32> to vector<16xf32>
    %38 = vector.shape_cast %37 : vector<16xf32> to vector<1x16xf32>
    %39 = math.log %38 : vector<1x16xf32>
    %40 = arith.addf %31, %39 : vector<1x16xf32>
    %c0_20 = arith.constant 0 : index
    %c0_21 = arith.constant 0 : index
    %41 = vector.load %arg6[%c0_20, %c0_21] : memref<1x16xf32, #tpu.memory_space<vmem>>, vector<1x16xf32>
    tpu.vector_store %arg6[%c0_20, %c0_21], %40 {strides = array<i32>} : memref<1x16xf32, #tpu.memory_space<vmem>>, vector<1x16xf32>,
    return
  }
  func.func @transform_0(%arg0: i32) -> (i32, i32) {
    %c0_i32 = arith.constant 0 : i32
    %c0_i32_0 = arith.constant 0 : i32
    return %c0_i32, %arg0 : i32, i32
  }
  func.func @transform_1(%arg0: i32) -> (i32, i32) {
    %c0_i32 = arith.constant 0 : i32
    %c0_i32_0 = arith.constant 0 : i32
    %c0_i32_1 = arith.constant 0 : i32
    return %c0_i32, %c0_i32_0 : i32, i32
  }
  func.func @transform_2(%arg0: i32) -> (i32, i32) {
    %c0_i32 = arith.constant 0 : i32
    %c0_i32_0 = arith.constant 0 : i32
    %c0_i32_1 = arith.constant 0 : i32
    return %c0_i32, %c0_i32_0 : i32, i32
  }
  func.func @transform_3(%arg0: i32) -> (i32, i32) {
    %c0_i32 = arith.constant 0 : i32
    %c0_i32_0 = arith.constant 0 : i32
    %c0_i32_1 = arith.constant 0 : i32
    return %c0_i32, %c0_i32_0 : i32, i32
  }
  func.func @transform_4(%arg0: i32) -> (i32, i32) {
    %c0_i32 = arith.constant 0 : i32
    %c0_i32_0 = arith.constant 0 : i32
    return %c0_i32, %arg0 : i32, i32
  }
  func.func @transform_5(%arg0: i32) -> (i32, i32) {
    %c0_i32 = arith.constant 0 : i32
    %c0_i32_0 = arith.constant 0 : i32
    return %c0_i32, %arg0 : i32, i32
  }
}

</mosaic_0001>

<llo_original>
// kernel: proxy_nca_forward.1
$region0: #{proxy_nca_forward.1}
  #allocation0 [shape = 'u32[]', space=smem, size = 0x4, offset = 0x4, fixed_abs, tag = 'smem constant byte address 0x4 - core index']
  #allocation1 [shape = 'u32[72,128]{1,0:T(1,128)}', space=vmem, size = 0x9000, scoped, tag = 'internal scratch']
  %s0 = inlined_call_operand.vmem [shape: f32[2048,16], index: 0, kind: input, shape index: {}]
  %s1 = inlined_call_operand.vmem [shape: f32[128,2048], index: 1, kind: input, shape index: {}]
  %s2 = inlined_call_operand.vmem [shape: f32[128,1], index: 2, kind: input, shape index: {}]
  %s3 = inlined_call_operand.vmem [shape: f32[16,128], index: 3, kind: input, shape index: {}]
  %s4 = inlined_call_operand.vmem [shape: s32[1,16], index: 4, kind: input, shape index: {}]
  %s5 = inlined_call_operand.vmem [shape: f32[1,16], index: 5, kind: output, shape index: {}]
  %s6 = sld [smem:[#allocation0]]
  $region30: #{proxy_nca_forward.1} parent=0
    _
  %s8 = ssub.s32 1, %s6
  %s9 = scalar_select 0, %s8, %s6
  // Predicated region
  $region2: #{proxy_nca_forward.1} parent=0 // pred_check
    _
  $region3: #{proxy_nca_forward.1} parent=0 // pred_check_branch
    %11 = sbr.rel (0) target = $region5
  $region4: #{proxy_nca_forward.1} parent=0 // pred_region
    _
  $region5: #{proxy_nca_forward.1} parent=0 // pred_fallthru
    _
  // Predicated region
  $region6: #{proxy_nca_forward.1} parent=0 // pred_check
    _
  $region7: #{proxy_nca_forward.1} parent=0 // pred_check_branch
    %13 = sbr.rel (0) target = $region9
  $region8: #{proxy_nca_forward.1} parent=0 // pred_region
    _
  $region9: #{proxy_nca_forward.1} parent=0 // pred_fallthru
    _
  // Predicated region
  $region10: #{proxy_nca_forward.1} parent=0 // pred_check
    _
  $region11: #{proxy_nca_forward.1} parent=0 // pred_check_branch
    %15 = sbr.rel (0) target = $region13
  $region12: #{proxy_nca_forward.1} parent=0 // pred_region
    _
  $region13: #{proxy_nca_forward.1} parent=0 // pred_fallthru
    _
  // Predicated region
  $region14: #{proxy_nca_forward.1} parent=0 // pred_check
    _
  $region15: #{proxy_nca_forward.1} parent=0 // pred_check_branch
    %17 = sbr.rel (0) target = $region17
  $region16: #{proxy_nca_forward.1} parent=0 // pred_region
    _
  $region17: #{proxy_nca_forward.1} parent=0 // pred_fallthru
    _
  // Predicated region
  $region18: #{proxy_nca_forward.1} parent=0 // pred_check
    _
  $region19: #{proxy_nca_forward.1} parent=0 // pred_check_branch
    %19 = sbr.rel (0) target = $region21
  $region20: #{proxy_nca_forward.1} parent=0 // pred_region
    _
  $region21: #{proxy_nca_forward.1} parent=0 // pred_fallthru
    _
  %v20 = vld [vmem:[%s1] sm:$0xff]
  %v21 = vld [vmem:[%s1 + $0x8] sm:$0xff]
  %v22 = vld [vmem:[%s1 + $0x10] sm:$0xff]
  %v23 = vld [vmem:[%s1 + $0x18] sm:$0xff]
  %v24 = vld [vmem:[%s1 + $0x20] sm:$0xff]
  %v25 = vld [vmem:[%s1 + $0x28] sm:$0xff]
  %v26 = vld [vmem:[%s1 + $0x30] sm:$0xff]
  %v27 = vld [vmem:[%s1 + $0x38] sm:$0xff]
  %v28 = vld [vmem:[%s1 + $0x40] sm:$0xff]
  %v29 = vld [vmem:[%s1 + $0x48] sm:$0xff]
  %v30 = vld [vmem:[%s1 + $0x50] sm:$0xff]
  %v31 = vld [vmem:[%s1 + $0x58] sm:$0xff]
  %v32 = vld [vmem:[%s1 + $0x60] sm:$0xff]
  %v33 = vld [vmem:[%s1 + $0x68] sm:$0xff]
  %v34 = vld [vmem:[%s1 + $0x70] sm:$0xff]
  %v35 = vld [vmem:[%s1 + $0x78] sm:$0xff]
  %v36 = vld [vmem:[%s1 + $0x80] sm:$0xff]
  %v37 = vld [vmem:[%s1 + $0x88] sm:$0xff]
  %v38 = vld [vmem:[%s1 + $0x90] sm:$0xff]
  %v39 = vld [vmem:[%s1 + $0x98] sm:$0xff]
  %v40 = vld [vmem:[%s1 + $0xa0] sm:$0xff]
  %v41 = vld [vmem:[%s1 + $0xa8] sm:$0xff]
  %v42 = vld [vmem:[%s1 + $0xb0] sm:$0xff]
  %v43 = vld [vmem:[%s1 + $0xb8] sm:$0xff]
  %v44 = vld [vmem:[%s1 + $0xc0] sm:$0xff]
  %v45 = vld [vmem:[%s1 + $0xc8] sm:$0xff]
  %v46 = vld [vmem:[%s1 + $0xd0] sm:$0xff]
  %v47 = vld [vmem:[%s1 + $0xd8] sm:$0xff]
  %v48 = vld [vmem:[%s1 + $0xe0] sm:$0xff]
  %v49 = vld [vmem:[%s1 + $0xe8] sm:$0xff]
  %v50 = vld [vmem:[%s1 + $0xf0] sm:$0xff]
  %v51 = vld [vmem:[%s1 + $0xf8] sm:$0xff]
  %v52 = vld [vmem:[%s1 + $0x100] sm:$0xff]
  %v53 = vld [vmem:[%s1 + $0x108] sm:$0xff]
  %v54 = vld [vmem:[%s1 + $0x110] sm:$0xff]
  %v55 = vld [vmem:[%s1 + $0x118] sm:$0xff]
  %v56 = vld [vmem:[%s1 + $0x120] sm:$0xff]
  %v57 = vld [vmem:[%s1 + $0x128] sm:$0xff]
  %v58 = vld [vmem:[%s1 + $0x130] sm:$0xff]
  %v59 = vld [vmem:[%s1 + $0x138] sm:$0xff]
  %v60 = vld [vmem:[%s1 + $0x140] sm:$0xff]
  %v61 = vld [vmem:[%s1 + $0x148] sm:$0xff]
  %v62 = vld [vmem:[%s1 + $0x150] sm:$0xff]
  %v63 = vld [vmem:[%s1 + $0x158] sm:$0xff]
  %v64 = vld [vmem:[%s1 + $0x160] sm:$0xff]
  %v65 = vld [vmem:[%s1 + $0x168] sm:$0xff]
  %v66 = vld [vmem:[%s1 + $0x170] sm:$0xff]
  %v67 = vld [vmem:[%s1 + $0x178] sm:$0xff]
  %v68 = vld [vmem:[%s1 + $0x180] sm:$0xff]
  %v69 = vld [vmem:[%s1 + $0x188] sm:$0xff]
  %v70 = vld [vmem:[%s1 + $0x190] sm:$0xff]
  %v71 = vld [vmem:[%s1 + $0x198] sm:$0xff]
  %v72 = vld [vmem:[%s1 + $0x1a0] sm:$0xff]
  %v73 = vld [vmem:[%s1 + $0x1a8] sm:$0xff]
  %v74 = vld [vmem:[%s1 + $0x1b0] sm:$0xff]
  %v75 = vld [vmem:[%s1 + $0x1b8] sm:$0xff]
  %v76 = vld [vmem:[%s1 + $0x1c0] sm:$0xff]
  %v77 = vld [vmem:[%s1 + $0x1c8] sm:$0xff]
  %v78 = vld [vmem:[%s1 + $0x1d0] sm:$0xff]
  %v79 = vld [vmem:[%s1 + $0x1d8] sm:$0xff]
  %v80 = vld [vmem:[%s1 + $0x1e0] sm:$0xff]
  %v81 = vld [vmem:[%s1 + $0x1e8] sm:$0xff]
  %v82 = vld [vmem:[%s1 + $0x1f0] sm:$0xff]
  %v83 = vld [vmem:[%s1 + $0x1f8] sm:$0xff]
  %v84 = vld [vmem:[%s1 + $0x200] sm:$0xff]
  %v85 = vld [vmem:[%s1 + $0x208] sm:$0xff]
  %v86 = vld [vmem:[%s1 + $0x210] sm:$0xff]
  %v87 = vld [vmem:[%s1 + $0x218] sm:$0xff]
  %v88 = vld [vmem:[%s1 + $0x220] sm:$0xff]
  %v89 = vld [vmem:[%s1 + $0x228] sm:$0xff]
  %v90 = vld [vmem:[%s1 + $0x230] sm:$0xff]
  %v91 = vld [vmem:[%s1 + $0x238] sm:$0xff]
  %v92 = vld [vmem:[%s1 + $0x240] sm:$0xff]
  %v93 = vld [vmem:[%s1 + $0x248] sm:$0xff]
  %v94 = vld [vmem:[%s1 + $0x250] sm:$0xff]
  %v95 = vld [vmem:[%s1 + $0x258] sm:$0xff]
  %v96 = vld [vmem:[%s1 + $0x260] sm:$0xff]
  %v97 = vld [vmem:[%s1 + $0x268] sm:$0xff]
  %v98 = vld [vmem:[%s1 + $0x270] sm:$0xff]
  %v99 = vld [vmem:[%s1 + $0x278] sm:$0xff]
  %v100 = vld [vmem:[%s1 + $0x280] sm:$0xff]
  %v101 = vld [vmem:[%s1 + $0x288] sm:$0xff]
  %v102 = vld [vmem:[%s1 + $0x290] sm:$0xff]
  %v103 = vld [vmem:[%s1 + $0x298] sm:$0xff]
  %v104 = vld [vmem:[%s1 + $0x2a0] sm:$0xff]
  %v105 = vld [vmem:[%s1 + $0x2a8] sm:$0xff]
  %v106 = vld [vmem:[%s1 + $0x2b0] sm:$0xff]
  %v107 = vld [vmem:[%s1 + $0x2b8] sm:$0xff]
  %v108 = vld [vmem:[%s1 + $0x2c0] sm:$0xff]
  %v109 = vld [vmem:[%s1 + $0x2c8] sm:$0xff]
  %v110 = vld [vmem:[%s1 + $0x2d0] sm:$0xff]
  %v111 = vld [vmem:[%s1 + $0x2d8] sm:$0xff]
  %v112 = vld [vmem:[%s1 + $0x2e0] sm:$0xff]
  %v113 = vld [vmem:[%s1 + $0x2e8] sm:$0xff]
  %v114 = vld [vmem:[%s1 + $0x2f0] sm:$0xff]
  %v115 = vld [vmem:[%s1 + $0x2f8] sm:$0xff]
  %v116 = vld [vmem:[%s1 + $0x300] sm:$0xff]
  %v117 = vld [vmem:[%s1 + $0x308] sm:$0xff]
  %v118 = vld [vmem:[%s1 + $0x310] sm:$0xff]
  %v119 = vld [vmem:[%s1 + $0x318] sm:$0xff]
  %v120 = vld [vmem:[%s1 + $0x320] sm:$0xff]
  %v121 = vld [vmem:[%s1 + $0x328] sm:$0xff]
  %v122 = vld [vmem:[%s1 + $0x330] sm:$0xff]
  %v123 = vld [vmem:[%s1 + $0x338] sm:$0xff]
  %v124 = vld [vmem:[%s1 + $0x340] sm:$0xff]
  %v125 = vld [vmem:[%s1 + $0x348] sm:$0xff]
  %v126 = vld [vmem:[%s1 + $0x350] sm:$0xff]
  %v127 = vld [vmem:[%s1 + $0x358] sm:$0xff]
  %v128 = vld [vmem:[%s1 + $0x360] sm:$0xff]
  %v129 = vld [vmem:[%s1 + $0x368] sm:$0xff]
  %v130 = vld [vmem:[%s1 + $0x370] sm:$0xff]
  %v131 = vld [vmem:[%s1 + $0x378] sm:$0xff]
  %v132 = vld [vmem:[%s1 + $0x380] sm:$0xff]
  %v133 = vld [vmem:[%s1 + $0x388] sm:$0xff]
  %v134 = vld [vmem:[%s1 + $0x390] sm:$0xff]
  %v135 = vld [vmem:[%s1 + $0x398] sm:$0xff]
  %v136 = vld [vmem:[%s1 + $0x3a0] sm:$0xff]
  %v137 = vld [vmem:[%s1 + $0x3a8] sm:$0xff]
  %v138 = vld [vmem:[%s1 + $0x3b0] sm:$0xff]
  %v139 = vld [vmem:[%s1 + $0x3b8] sm:$0xff]
  %v140 = vld [vmem:[%s1 + $0x3c0] sm:$0xff]
  %v141 = vld [vmem:[%s1 + $0x3c8] sm:$0xff]
  %v142 = vld [vmem:[%s1 + $0x3d0] sm:$0xff]
  %v143 = vld [vmem:[%s1 + $0x3d8] sm:$0xff]
  %v144 = vld [vmem:[%s1 + $0x3e0] sm:$0xff]
  %v145 = vld [vmem:[%s1 + $0x3e8] sm:$0xff]
  %v146 = vld [vmem:[%s1 + $0x3f0] sm:$0xff]
  %v147 = vld [vmem:[%s1 + $0x3f8] sm:$0xff]
  %v148 = vld [vmem:[%s1 + $0x400] sm:$0xff]
  %v149 = vld [vmem:[%s1 + $0x408] sm:$0xff]
  %v150 = vld [vmem:[%s1 + $0x410] sm:$0xff]
  %v151 = vld [vmem:[%s1 + $0x418] sm:$0xff]
  %v152 = vld [vmem:[%s1 + $0x420] sm:$0xff]
  %v153 = vld [vmem:[%s1 + $0x428] sm:$0xff]
  %v154 = vld [vmem:[%s1 + $0x430] sm:$0xff]
  %v155 = vld [vmem:[%s1 + $0x438] sm:$0xff]
  %v156 = vld [vmem:[%s1 + $0x440] sm:$0xff]
  %v157 = vld [vmem:[%s1 + $0x448] sm:$0xff]
  %v158 = vld [vmem:[%s1 + $0x450] sm:$0xff]
  %v159 = vld [vmem:[%s1 + $0x458] sm:$0xff]
  %v160 = vld [vmem:[%s1 + $0x460] sm:$0xff]
  %v161 = vld [vmem:[%s1 + $0x468] sm:$0xff]
  %v162 = vld [vmem:[%s1 + $0x470] sm:$0xff]
  %v163 = vld [vmem:[%s1 + $0x478] sm:$0xff]
  %v164 = vld [vmem:[%s1 + $0x480] sm:$0xff]
  %v165 = vld [vmem:[%s1 + $0x488] sm:$0xff]
  %v166 = vld [vmem:[%s1 + $0x490] sm:$0xff]
  %v167 = vld [vmem:[%s1 + $0x498] sm:$0xff]
  %v168 = vld [vmem:[%s1 + $0x4a0] sm:$0xff]
  %v169 = vld [vmem:[%s1 + $0x4a8] sm:$0xff]
  %v170 = vld [vmem:[%s1 + $0x4b0] sm:$0xff]
  %v171 = vld [vmem:[%s1 + $0x4b8] sm:$0xff]
  %v172 = vld [vmem:[%s1 + $0x4c0] sm:$0xff]
  %v173 = vld [vmem:[%s1 + $0x4c8] sm:$0xff]
  %v174 = vld [vmem:[%s1 + $0x4d0] sm:$0xff]
  %v175 = vld [vmem:[%s1 + $0x4d8] sm:$0xff]
  %v176 = vld [vmem:[%s1 + $0x4e0] sm:$0xff]
  %v177 = vld [vmem:[%s1 + $0x4e8] sm:$0xff]
  %v178 = vld [vmem:[%s1 + $0x4f0] sm:$0xff]
  %v179 = vld [vmem:[%s1 + $0x4f8] sm:$0xff]
  %v180 = vld [vmem:[%s1 + $0x500] sm:$0xff]
  %v181 = vld [vmem:[%s1 + $0x508] sm:$0xff]
  %v182 = vld [vmem:[%s1 + $0x510] sm:$0xff]
  %v183 = vld [vmem:[%s1 + $0x518] sm:$0xff]
  %v184 = vld [vmem:[%s1 + $0x520] sm:$0xff]
  %v185 = vld [vmem:[%s1 + $0x528] sm:$0xff]
  %v186 = vld [vmem:[%s1 + $0x530] sm:$0xff]
  %v187 = vld [vmem:[%s1 + $0x538] sm:$0xff]
  %v188 = vld [vmem:[%s1 + $0x540] sm:$0xff]
  %v189 = vld [vmem:[%s1 + $0x548] sm:$0xff]
  %v190 = vld [vmem:[%s1 + $0x550] sm:$0xff]
  %v191 = vld [vmem:[%s1 + $0x558] sm:$0xff]
  %v192 = vld [vmem:[%s1 + $0x560] sm:$0xff]
  %v193 = vld [vmem:[%s1 + $0x568] sm:$0xff]
  %v194 = vld [vmem:[%s1 + $0x570] sm:$0xff]
  %v195 = vld [vmem:[%s1 + $0x578] sm:$0xff]
  %v196 = vld [vmem:[%s1 + $0x580] sm:$0xff]
  %v197 = vld [vmem:[%s1 + $0x588] sm:$0xff]
  %v198 = vld [vmem:[%s1 + $0x590] sm:$0xff]
  %v199 = vld [vmem:[%s1 + $0x598] sm:$0xff]
  %v200 = vld [vmem:[%s1 + $0x5a0] sm:$0xff]
  %v201 = vld [vmem:[%s1 + $0x5a8] sm:$0xff]
  %v202 = vld [vmem:[%s1 + $0x5b0] sm:$0xff]
  %v203 = vld [vmem:[%s1 + $0x5b8] sm:$0xff]
  %v204 = vld [vmem:[%s1 + $0x5c0] sm:$0xff]
  %v205 = vld [vmem:[%s1 + $0x5c8] sm:$0xff]
  %v206 = vld [vmem:[%s1 + $0x5d0] sm:$0xff]
  %v207 = vld [vmem:[%s1 + $0x5d8] sm:$0xff]
  %v208 = vld [vmem:[%s1 + $0x5e0] sm:$0xff]
  %v209 = vld [vmem:[%s1 + $0x5e8] sm:$0xff]
  %v210 = vld [vmem:[%s1 + $0x5f0] sm:$0xff]
  %v211 = vld [vmem:[%s1 + $0x5f8] sm:$0xff]
  %v212 = vld [vmem:[%s1 + $0x600] sm:$0xff]
  %v213 = vld [vmem:[%s1 + $0x608] sm:$0xff]
  %v214 = vld [vmem:[%s1 + $0x610] sm:$0xff]
  %v215 = vld [vmem:[%s1 + $0x618] sm:$0xff]
  %v216 = vld [vmem:[%s1 + $0x620] sm:$0xff]
  %v217 = vld [vmem:[%s1 + $0x628] sm:$0xff]
  %v218 = vld [vmem:[%s1 + $0x630] sm:$0xff]
  %v219 = vld [vmem:[%s1 + $0x638] sm:$0xff]
  %v220 = vld [vmem:[%s1 + $0x640] sm:$0xff]
  %v221 = vld [vmem:[%s1 + $0x648] sm:$0xff]
  %v222 = vld [vmem:[%s1 + $0x650] sm:$0xff]
  %v223 = vld [vmem:[%s1 + $0x658] sm:$0xff]
  %v224 = vld [vmem:[%s1 + $0x660] sm:$0xff]
  %v225 = vld [vmem:[%s1 + $0x668] sm:$0xff]
  %v226 = vld [vmem:[%s1 + $0x670] sm:$0xff]
  %v227 = vld [vmem:[%s1 + $0x678] sm:$0xff]
  %v228 = vld [vmem:[%s1 + $0x680] sm:$0xff]
  %v229 = vld [vmem:[%s1 + $0x688] sm:$0xff]
  %v230 = vld [vmem:[%s1 + $0x690] sm:$0xff]
  %v231 = vld [vmem:[%s1 + $0x698] sm:$0xff]
  %v232 = vld [vmem:[%s1 + $0x6a0] sm:$0xff]
  %v233 = vld [vmem:[%s1 + $0x6a8] sm:$0xff]
  %v234 = vld [vmem:[%s1 + $0x6b0] sm:$0xff]
  %v235 = vld [vmem:[%s1 + $0x6b8] sm:$0xff]
  %v236 = vld [vmem:[%s1 + $0x6c0] sm:$0xff]
  %v237 = vld [vmem:[%s1 + $0x6c8] sm:$0xff]
  %v238 = vld [vmem:[%s1 + $0x6d0] sm:$0xff]
  %v239 = vld [vmem:[%s1 + $0x6d8] sm:$0xff]
  %v240 = vld [vmem:[%s1 + $0x6e0] sm:$0xff]
  %v241 = vld [vmem:[%s1 + $0x6e8] sm:$0xff]
  %v242 = vld [vmem:[%s1 + $0x6f0] sm:$0xff]
  %v243 = vld [vmem:[%s1 + $0x6f8] sm:$0xff]
  %v244 = vld [vmem:[%s1 + $0x700] sm:$0xff]
  %v245 = vld [vmem:[%s1 + $0x708] sm:$0xff]
  %v246 = vld [vmem:[%s1 + $0x710] sm:$0xff]
  %v247 = vld [vmem:[%s1 + $0x718] sm:$0xff]
  %v248 = vld [vmem:[%s1 + $0x720] sm:$0xff]
  %v249 = vld [vmem:[%s1 + $0x728] sm:$0xff]
  %v250 = vld [vmem:[%s1 + $0x730] sm:$0xff]
  %v251 = vld [vmem:[%s1 + $0x738] sm:$0xff]
  %v252 = vld [vmem:[%s1 + $0x740] sm:$0xff]
  %v253 = vld [vmem:[%s1 + $0x748] sm:$0xff]
  %v254 = vld [vmem:[%s1 + $0x750] sm:$0xff]
  %v255 = vld [vmem:[%s1 + $0x758] sm:$0xff]
  %v256 = vld [vmem:[%s1 + $0x760] sm:$0xff]
  %v257 = vld [vmem:[%s1 + $0x768] sm:$0xff]
  %v258 = vld [vmem:[%s1 + $0x770] sm:$0xff]
  %v259 = vld [vmem:[%s1 + $0x778] sm:$0xff]
  %v260 = vld [vmem:[%s1 + $0x780] sm:$0xff]
  %v261 = vld [vmem:[%s1 + $0x788] sm:$0xff]
  %v262 = vld [vmem:[%s1 + $0x790] sm:$0xff]
  %v263 = vld [vmem:[%s1 + $0x798] sm:$0xff]
  %v264 = vld [vmem:[%s1 + $0x7a0] sm:$0xff]
  %v265 = vld [vmem:[%s1 + $0x7a8] sm:$0xff]
  %v266 = vld [vmem:[%s1 + $0x7b0] sm:$0xff]
  %v267 = vld [vmem:[%s1 + $0x7b8] sm:$0xff]
  %v268 = vld [vmem:[%s1 + $0x7c0] sm:$0xff]
  %v269 = vld [vmem:[%s1 + $0x7c8] sm:$0xff]
  %v270 = vld [vmem:[%s1 + $0x7d0] sm:$0xff]
  %v271 = vld [vmem:[%s1 + $0x7d8] sm:$0xff]
  %v272 = vld [vmem:[%s1 + $0x7e0] sm:$0xff]
  %v273 = vld [vmem:[%s1 + $0x7e8] sm:$0xff]
  %v274 = vld [vmem:[%s1 + $0x7f0] sm:$0xff]
  %v275 = vld [vmem:[%s1 + $0x7f8] sm:$0xff]
  %v276 = vld [vmem:[%s0] sm:$0xff]
  %v277 = vld [vmem:[%s0 + $0x8] sm:$0xff]
  %v278 = vld [vmem:[%s0 + $0x10] sm:$0xff]
  %v279 = vld [vmem:[%s0 + $0x18] sm:$0xff]
  %v280 = vld [vmem:[%s0 + $0x20] sm:$0xff]
  %v281 = vld [vmem:[%s0 + $0x28] sm:$0xff]
  %v282 = vld [vmem:[%s0 + $0x30] sm:$0xff]
  %v283 = vld [vmem:[%s0 + $0x38] sm:$0xff]
  %v284 = vld [vmem:[%s0 + $0x40] sm:$0xff]
  %v285 = vld [vmem:[%s0 + $0x48] sm:$0xff]
  %v286 = vld [vmem:[%s0 + $0x50] sm:$0xff]
  %v287 = vld [vmem:[%s0 + $0x58] sm:$0xff]
  %v288 = vld [vmem:[%s0 + $0x60] sm:$0xff]
  %v289 = vld [vmem:[%s0 + $0x68] sm:$0xff]
  %v290 = vld [vmem:[%s0 + $0x70] sm:$0xff]
  %v291 = vld [vmem:[%s0 + $0x78] sm:$0xff]
  %v292 = vld [vmem:[%s0 + $0x80] sm:$0xff]
  %v293 = vld [vmem:[%s0 + $0x88] sm:$0xff]
  %v294 = vld [vmem:[%s0 + $0x90] sm:$0xff]
  %v295 = vld [vmem:[%s0 + $0x98] sm:$0xff]
  %v296 = vld [vmem:[%s0 + $0xa0] sm:$0xff]
  %v297 = vld [vmem:[%s0 + $0xa8] sm:$0xff]
  %v298 = vld [vmem:[%s0 + $0xb0] sm:$0xff]
  %v299 = vld [vmem:[%s0 + $0xb8] sm:$0xff]
  %v300 = vld [vmem:[%s0 + $0xc0] sm:$0xff]
  %v301 = vld [vmem:[%s0 + $0xc8] sm:$0xff]
  %v302 = vld [vmem:[%s0 + $0xd0] sm:$0xff]
  %v303 = vld [vmem:[%s0 + $0xd8] sm:$0xff]
  %v304 = vld [vmem:[%s0 + $0xe0] sm:$0xff]
  %v305 = vld [vmem:[%s0 + $0xe8] sm:$0xff]
  %v306 = vld [vmem:[%s0 + $0xf0] sm:$0xff]
  %v307 = vld [vmem:[%s0 + $0xf8] sm:$0xff]
  %v308 = vld [vmem:[%s0 + $0x100] sm:$0xff]
  %v309 = vld [vmem:[%s0 + $0x108] sm:$0xff]
  %v310 = vld [vmem:[%s0 + $0x110] sm:$0xff]
  %v311 = vld [vmem:[%s0 + $0x118] sm:$0xff]
  %v312 = vld [vmem:[%s0 + $0x120] sm:$0xff]
  %v313 = vld [vmem:[%s0 + $0x128] sm:$0xff]
  %v314 = vld [vmem:[%s0 + $0x130] sm:$0xff]
  %v315 = vld [vmem:[%s0 + $0x138] sm:$0xff]
  %v316 = vld [vmem:[%s0 + $0x140] sm:$0xff]
  %v317 = vld [vmem:[%s0 + $0x148] sm:$0xff]
  %v318 = vld [vmem:[%s0 + $0x150] sm:$0xff]
  %v319 = vld [vmem:[%s0 + $0x158] sm:$0xff]
  %v320 = vld [vmem:[%s0 + $0x160] sm:$0xff]
  %v321 = vld [vmem:[%s0 + $0x168] sm:$0xff]
  %v322 = vld [vmem:[%s0 + $0x170] sm:$0xff]
  %v323 = vld [vmem:[%s0 + $0x178] sm:$0xff]
  %v324 = vld [vmem:[%s0 + $0x180] sm:$0xff]
  %v325 = vld [vmem:[%s0 + $0x188] sm:$0xff]
  %v326 = vld [vmem:[%s0 + $0x190] sm:$0xff]
  %v327 = vld [vmem:[%s0 + $0x198] sm:$0xff]
  %v328 = vld [vmem:[%s0 + $0x1a0] sm:$0xff]
  %v329 = vld [vmem:[%s0 + $0x1a8] sm:$0xff]
  %v330 = vld [vmem:[%s0 + $0x1b0] sm:$0xff]
  %v331 = vld [vmem:[%s0 + $0x1b8] sm:$0xff]
  %v332 = vld [vmem:[%s0 + $0x1c0] sm:$0xff]
  %v333 = vld [vmem:[%s0 + $0x1c8] sm:$0xff]
  %v334 = vld [vmem:[%s0 + $0x1d0] sm:$0xff]
  %v335 = vld [vmem:[%s0 + $0x1d8] sm:$0xff]
  %v336 = vld [vmem:[%s0 + $0x1e0] sm:$0xff]
  %v337 = vld [vmem:[%s0 + $0x1e8] sm:$0xff]
  %v338 = vld [vmem:[%s0 + $0x1f0] sm:$0xff]
  %v339 = vld [vmem:[%s0 + $0x1f8] sm:$0xff]
  %v340 = vld [vmem:[%s0 + $0x200] sm:$0xff]
  %v341 = vld [vmem:[%s0 + $0x208] sm:$0xff]
  %v342 = vld [vmem:[%s0 + $0x210] sm:$0xff]
  %v343 = vld [vmem:[%s0 + $0x218] sm:$0xff]
  %v344 = vld [vmem:[%s0 + $0x220] sm:$0xff]
  %v345 = vld [vmem:[%s0 + $0x228] sm:$0xff]
  %v346 = vld [vmem:[%s0 + $0x230] sm:$0xff]
  %v347 = vld [vmem:[%s0 + $0x238] sm:$0xff]
  %v348 = vld [vmem:[%s0 + $0x240] sm:$0xff]
  %v349 = vld [vmem:[%s0 + $0x248] sm:$0xff]
  %v350 = vld [vmem:[%s0 + $0x250] sm:$0xff]
  %v351 = vld [vmem:[%s0 + $0x258] sm:$0xff]
  %v352 = vld [vmem:[%s0 + $0x260] sm:$0xff]
  %v353 = vld [vmem:[%s0 + $0x268] sm:$0xff]
  %v354 = vld [vmem:[%s0 + $0x270] sm:$0xff]
  %v355 = vld [vmem:[%s0 + $0x278] sm:$0xff]
  %v356 = vld [vmem:[%s0 + $0x280] sm:$0xff]
  %v357 = vld [vmem:[%s0 + $0x288] sm:$0xff]
  %v358 = vld [vmem:[%s0 + $0x290] sm:$0xff]
  %v359 = vld [vmem:[%s0 + $0x298] sm:$0xff]
  %v360 = vld [vmem:[%s0 + $0x2a0] sm:$0xff]
  %v361 = vld [vmem:[%s0 + $0x2a8] sm:$0xff]
  %v362 = vld [vmem:[%s0 + $0x2b0] sm:$0xff]
  %v363 = vld [vmem:[%s0 + $0x2b8] sm:$0xff]
  %v364 = vld [vmem:[%s0 + $0x2c0] sm:$0xff]
  %v365 = vld [vmem:[%s0 + $0x2c8] sm:$0xff]
  %v366 = vld [vmem:[%s0 + $0x2d0] sm:$0xff]
  %v367 = vld [vmem:[%s0 + $0x2d8] sm:$0xff]
  %v368 = vld [vmem:[%s0 + $0x2e0] sm:$0xff]
  %v369 = vld [vmem:[%s0 + $0x2e8] sm:$0xff]
  %v370 = vld [vmem:[%s0 + $0x2f0] sm:$0xff]
  %v371 = vld [vmem:[%s0 + $0x2f8] sm:$0xff]
  %v372 = vld [vmem:[%s0 + $0x300] sm:$0xff]
  %v373 = vld [vmem:[%s0 + $0x308] sm:$0xff]
  %v374 = vld [vmem:[%s0 + $0x310] sm:$0xff]
  %v375 = vld [vmem:[%s0 + $0x318] sm:$0xff]
  %v376 = vld [vmem:[%s0 + $0x320] sm:$0xff]
  %v377 = vld [vmem:[%s0 + $0x328] sm:$0xff]
  %v378 = vld [vmem:[%s0 + $0x330] sm:$0xff]
  %v379 = vld [vmem:[%s0 + $0x338] sm:$0xff]
  %v380 = vld [vmem:[%s0 + $0x340] sm:$0xff]
  %v381 = vld [vmem:[%s0 + $0x348] sm:$0xff]
  %v382 = vld [vmem:[%s0 + $0x350] sm:$0xff]
  %v383 = vld [vmem:[%s0 + $0x358] sm:$0xff]
  %v384 = vld [vmem:[%s0 + $0x360] sm:$0xff]
  %v385 = vld [vmem:[%s0 + $0x368] sm:$0xff]
  %v386 = vld [vmem:[%s0 + $0x370] sm:$0xff]
  %v387 = vld [vmem:[%s0 + $0x378] sm:$0xff]
  %v388 = vld [vmem:[%s0 + $0x380] sm:$0xff]
  %v389 = vld [vmem:[%s0 + $0x388] sm:$0xff]
  %v390 = vld [vmem:[%s0 + $0x390] sm:$0xff]
  %v391 = vld [vmem:[%s0 + $0x398] sm:$0xff]
  %v392 = vld [vmem:[%s0 + $0x3a0] sm:$0xff]
  %v393 = vld [vmem:[%s0 + $0x3a8] sm:$0xff]
  %v394 = vld [vmem:[%s0 + $0x3b0] sm:$0xff]
  %v395 = vld [vmem:[%s0 + $0x3b8] sm:$0xff]
  %v396 = vld [vmem:[%s0 + $0x3c0] sm:$0xff]
  %v397 = vld [vmem:[%s0 + $0x3c8] sm:$0xff]
  %v398 = vld [vmem:[%s0 + $0x3d0] sm:$0xff]
  %v399 = vld [vmem:[%s0 + $0x3d8] sm:$0xff]
  %v400 = vld [vmem:[%s0 + $0x3e0] sm:$0xff]
  %v401 = vld [vmem:[%s0 + $0x3e8] sm:$0xff]
  %v402 = vld [vmem:[%s0 + $0x3f0] sm:$0xff]
  %v403 = vld [vmem:[%s0 + $0x3f8] sm:$0xff]
  %v404 = vld [vmem:[%s0 + $0x400] sm:$0xff]
  %v405 = vld [vmem:[%s0 + $0x408] sm:$0xff]
  %v406 = vld [vmem:[%s0 + $0x410] sm:$0xff]
  %v407 = vld [vmem:[%s0 + $0x418] sm:$0xff]
  %v408 = vld [vmem:[%s0 + $0x420] sm:$0xff]
  %v409 = vld [vmem:[%s0 + $0x428] sm:$0xff]
  %v410 = vld [vmem:[%s0 + $0x430] sm:$0xff]
  %v411 = vld [vmem:[%s0 + $0x438] sm:$0xff]
  %v412 = vld [vmem:[%s0 + $0x440] sm:$0xff]
  %v413 = vld [vmem:[%s0 + $0x448] sm:$0xff]
  %v414 = vld [vmem:[%s0 + $0x450] sm:$0xff]
  %v415 = vld [vmem:[%s0 + $0x458] sm:$0xff]
  %v416 = vld [vmem:[%s0 + $0x460] sm:$0xff]
  %v417 = vld [vmem:[%s0 + $0x468] sm:$0xff]
  %v418 = vld [vmem:[%s0 + $0x470] sm:$0xff]
  %v419 = vld [vmem:[%s0 + $0x478] sm:$0xff]
  %v420 = vld [vmem:[%s0 + $0x480] sm:$0xff]
  %v421 = vld [vmem:[%s0 + $0x488] sm:$0xff]
  %v422 = vld [vmem:[%s0 + $0x490] sm:$0xff]
  %v423 = vld [vmem:[%s0 + $0x498] sm:$0xff]
  %v424 = vld [vmem:[%s0 + $0x4a0] sm:$0xff]
  %v425 = vld [vmem:[%s0 + $0x4a8] sm:$0xff]
  %v426 = vld [vmem:[%s0 + $0x4b0] sm:$0xff]
  %v427 = vld [vmem:[%s0 + $0x4b8] sm:$0xff]
  %v428 = vld [vmem:[%s0 + $0x4c0] sm:$0xff]
  %v429 = vld [vmem:[%s0 + $0x4c8] sm:$0xff]
  %v430 = vld [vmem:[%s0 + $0x4d0] sm:$0xff]
  %v431 = vld [vmem:[%s0 + $0x4d8] sm:$0xff]
  %v432 = vld [vmem:[%s0 + $0x4e0] sm:$0xff]
  %v433 = vld [vmem:[%s0 + $0x4e8] sm:$0xff]
  %v434 = vld [vmem:[%s0 + $0x4f0] sm:$0xff]
  %v435 = vld [vmem:[%s0 + $0x4f8] sm:$0xff]
  %v436 = vld [vmem:[%s0 + $0x500] sm:$0xff]
  %v437 = vld [vmem:[%s0 + $0x508] sm:$0xff]
  %v438 = vld [vmem:[%s0 + $0x510] sm:$0xff]
  %v439 = vld [vmem:[%s0 + $0x518] sm:$0xff]
  %v440 = vld [vmem:[%s0 + $0x520] sm:$0xff]
  %v441 = vld [vmem:[%s0 + $0x528] sm:$0xff]
  %v442 = vld [vmem:[%s0 + $0x530] sm:$0xff]
  %v443 = vld [vmem:[%s0 + $0x538] sm:$0xff]
  %v444 = vld [vmem:[%s0 + $0x540] sm:$0xff]
  %v445 = vld [vmem:[%s0 + $0x548] sm:$0xff]
  %v446 = vld [vmem:[%s0 + $0x550] sm:$0xff]
  %v447 = vld [vmem:[%s0 + $0x558] sm:$0xff]
  %v448 = vld [vmem:[%s0 + $0x560] sm:$0xff]
  %v449 = vld [vmem:[%s0 + $0x568] sm:$0xff]
  %v450 = vld [vmem:[%s0 + $0x570] sm:$0xff]
  %v451 = vld [vmem:[%s0 + $0x578] sm:$0xff]
  %v452 = vld [vmem:[%s0 + $0x580] sm:$0xff]
  %v453 = vld [vmem:[%s0 + $0x588] sm:$0xff]
  %v454 = vld [vmem:[%s0 + $0x590] sm:$0xff]
  %v455 = vld [vmem:[%s0 + $0x598] sm:$0xff]
  %v456 = vld [vmem:[%s0 + $0x5a0] sm:$0xff]
  %v457 = vld [vmem:[%s0 + $0x5a8] sm:$0xff]
  %v458 = vld [vmem:[%s0 + $0x5b0] sm:$0xff]
  %v459 = vld [vmem:[%s0 + $0x5b8] sm:$0xff]
  %v460 = vld [vmem:[%s0 + $0x5c0] sm:$0xff]
  %v461 = vld [vmem:[%s0 + $0x5c8] sm:$0xff]
  %v462 = vld [vmem:[%s0 + $0x5d0] sm:$0xff]
  %v463 = vld [vmem:[%s0 + $0x5d8] sm:$0xff]
  %v464 = vld [vmem:[%s0 + $0x5e0] sm:$0xff]
  %v465 = vld [vmem:[%s0 + $0x5e8] sm:$0xff]
  %v466 = vld [vmem:[%s0 + $0x5f0] sm:$0xff]
  %v467 = vld [vmem:[%s0 + $0x5f8] sm:$0xff]
  %v468 = vld [vmem:[%s0 + $0x600] sm:$0xff]
  %v469 = vld [vmem:[%s0 + $0x608] sm:$0xff]
  %v470 = vld [vmem:[%s0 + $0x610] sm:$0xff]
  %v471 = vld [vmem:[%s0 + $0x618] sm:$0xff]
  %v472 = vld [vmem:[%s0 + $0x620] sm:$0xff]
  %v473 = vld [vmem:[%s0 + $0x628] sm:$0xff]
  %v474 = vld [vmem:[%s0 + $0x630] sm:$0xff]
  %v475 = vld [vmem:[%s0 + $0x638] sm:$0xff]
  %v476 = vld [vmem:[%s0 + $0x640] sm:$0xff]
  %v477 = vld [vmem:[%s0 + $0x648] sm:$0xff]
  %v478 = vld [vmem:[%s0 + $0x650] sm:$0xff]
  %v479 = vld [vmem:[%s0 + $0x658] sm:$0xff]
  %v480 = vld [vmem:[%s0 + $0x660] sm:$0xff]
  %v481 = vld [vmem:[%s0 + $0x668] sm:$0xff]
  %v482 = vld [vmem:[%s0 + $0x670] sm:$0xff]
  %v483 = vld [vmem:[%s0 + $0x678] sm:$0xff]
  %v484 = vld [vmem:[%s0 + $0x680] sm:$0xff]
  %v485 = vld [vmem:[%s0 + $0x688] sm:$0xff]
  %v486 = vld [vmem:[%s0 + $0x690] sm:$0xff]
  %v487 = vld [vmem:[%s0 + $0x698] sm:$0xff]
  %v488 = vld [vmem:[%s0 + $0x6a0] sm:$0xff]
  %v489 = vld [vmem:[%s0 + $0x6a8] sm:$0xff]
  %v490 = vld [vmem:[%s0 + $0x6b0] sm:$0xff]
  %v491 = vld [vmem:[%s0 + $0x6b8] sm:$0xff]
  %v492 = vld [vmem:[%s0 + $0x6c0] sm:$0xff]
  %v493 = vld [vmem:[%s0 + $0x6c8] sm:$0xff]
  %v494 = vld [vmem:[%s0 + $0x6d0] sm:$0xff]
  %v495 = vld [vmem:[%s0 + $0x6d8] sm:$0xff]
  %v496 = vld [vmem:[%s0 + $0x6e0] sm:$0xff]
  %v497 = vld [vmem:[%s0 + $0x6e8] sm:$0xff]
  %v498 = vld [vmem:[%s0 + $0x6f0] sm:$0xff]
  %v499 = vld [vmem:[%s0 + $0x6f8] sm:$0xff]
  %v500 = vld [vmem:[%s0 + $0x700] sm:$0xff]
  %v501 = vld [vmem:[%s0 + $0x708] sm:$0xff]
  %v502 = vld [vmem:[%s0 + $0x710] sm:$0xff]
  %v503 = vld [vmem:[%s0 + $0x718] sm:$0xff]
  %v504 = vld [vmem:[%s0 + $0x720] sm:$0xff]
  %v505 = vld [vmem:[%s0 + $0x728] sm:$0xff]
  %v506 = vld [vmem:[%s0 + $0x730] sm:$0xff]
  %v507 = vld [vmem:[%s0 + $0x738] sm:$0xff]
  %v508 = vld [vmem:[%s0 + $0x740] sm:$0xff]
  %v509 = vld [vmem:[%s0 + $0x748] sm:$0xff]
  %v510 = vld [vmem:[%s0 + $0x750] sm:$0xff]
  %v511 = vld [vmem:[%s0 + $0x758] sm:$0xff]
  %v512 = vld [vmem:[%s0 + $0x760] sm:$0xff]
  %v513 = vld [vmem:[%s0 + $0x768] sm:$0xff]
  %v514 = vld [vmem:[%s0 + $0x770] sm:$0xff]
  %v515 = vld [vmem:[%s0 + $0x778] sm:$0xff]
  %v516 = vld [vmem:[%s0 + $0x780] sm:$0xff]
  %v517 = vld [vmem:[%s0 + $0x788] sm:$0xff]
  %v518 = vld [vmem:[%s0 + $0x790] sm:$0xff]
  %v519 = vld [vmem:[%s0 + $0x798] sm:$0xff]
  %v520 = vld [vmem:[%s0 + $0x7a0] sm:$0xff]
  %v521 = vld [vmem:[%s0 + $0x7a8] sm:$0xff]
  %v522 = vld [vmem:[%s0 + $0x7b0] sm:$0xff]
  %v523 = vld [vmem:[%s0 + $0x7b8] sm:$0xff]
  %v524 = vld [vmem:[%s0 + $0x7c0] sm:$0xff]
  %v525 = vld [vmem:[%s0 + $0x7c8] sm:$0xff]
  %v526 = vld [vmem:[%s0 + $0x7d0] sm:$0xff]
  %v527 = vld [vmem:[%s0 + $0x7d8] sm:$0xff]
  %v528 = vld [vmem:[%s0 + $0x7e0] sm:$0xff]
  %v529 = vld [vmem:[%s0 + $0x7e8] sm:$0xff]
  %v530 = vld [vmem:[%s0 + $0x7f0] sm:$0xff]
  %v531 = vld [vmem:[%s0 + $0x7f8] sm:$0xff]
  %v532 = vld [vmem:[%s2] sm:$0xff]
  %v533 = vld [vmem:[%s2 + $0x8] sm:$0xff]
  %v534 = vld [vmem:[%s2 + $0x10] sm:$0xff]
  %v535 = vld [vmem:[%s2 + $0x18] sm:$0xff]
  %v536 = vld [vmem:[%s2 + $0x20] sm:$0xff]
  %v537 = vld [vmem:[%s2 + $0x28] sm:$0xff]
  %v538 = vld [vmem:[%s2 + $0x30] sm:$0xff]
  %v539 = vld [vmem:[%s2 + $0x38] sm:$0xff]
  %v540 = vld [vmem:[%s2 + $0x40] sm:$0xff]
  %v541 = vld [vmem:[%s2 + $0x48] sm:$0xff]
  %v542 = vld [vmem:[%s2 + $0x50] sm:$0xff]
  %v543 = vld [vmem:[%s2 + $0x58] sm:$0xff]
  %v544 = vld [vmem:[%s2 + $0x60] sm:$0xff]
  %v545 = vld [vmem:[%s2 + $0x68] sm:$0xff]
  %v546 = vld [vmem:[%s2 + $0x70] sm:$0xff]
  %v547 = vld [vmem:[%s2 + $0x78] sm:$0xff]
  %549 = vset.pattern.permute.xlu0 0
  %550 = vperm.xlu0 %549, %v532
  %v551 = vpop.permute.xlu0 %550
  %554 = vset.pattern.permute.xlu0 0
  %555 = vperm.xlu0 %554, %v533
  %v556 = vpop.permute.xlu0 %555
  %559 = vset.pattern.permute.xlu0 0
  %560 = vperm.xlu0 %559, %v534
  %v561 = vpop.permute.xlu0 %560
  %564 = vset.pattern.permute.xlu0 0
  %565 = vperm.xlu0 %564, %v535
  %v566 = vpop.permute.xlu0 %565
  %569 = vset.pattern.permute.xlu0 0
  %570 = vperm.xlu0 %569, %v536
  %v571 = vpop.permute.xlu0 %570
  %574 = vset.pattern.permute.xlu0 0
  %575 = vperm.xlu0 %574, %v537
  %v576 = vpop.permute.xlu0 %575
  %579 = vset.pattern.permute.xlu0 0
  %580 = vperm.xlu0 %579, %v538
  %v581 = vpop.permute.xlu0 %580
  %584 = vset.pattern.permute.xlu0 0
  %585 = vperm.xlu0 %584, %v539
  %v586 = vpop.permute.xlu0 %585
  %589 = vset.pattern.permute.xlu0 0
  %590 = vperm.xlu0 %589, %v540
  %v591 = vpop.permute.xlu0 %590
  %594 = vset.pattern.permute.xlu0 0
  %595 = vperm.xlu0 %594, %v541
  %v596 = vpop.permute.xlu0 %595
  %599 = vset.pattern.permute.xlu0 0
  %600 = vperm.xlu0 %599, %v542
  %v601 = vpop.permute.xlu0 %600
  %604 = vset.pattern.permute.xlu0 0
  %605 = vperm.xlu0 %604, %v543
  %v606 = vpop.permute.xlu0 %605
  %609 = vset.pattern.permute.xlu0 0
  %610 = vperm.xlu0 %609, %v544
  %v611 = vpop.permute.xlu0 %610
  %614 = vset.pattern.permute.xlu0 0
  %615 = vperm.xlu0 %614, %v545
  %v616 = vpop.permute.xlu0 %615
  %619 = vset.pattern.permute.xlu0 0
  %620 = vperm.xlu0 %619, %v546
  %v621 = vpop.permute.xlu0 %620
  %624 = vset.pattern.permute.xlu0 0
  %625 = vperm.xlu0 %624, %v547
  %v626 = vpop.permute.xlu0 %625
  %628 = vmatpush.msra.mxu0 %v291
  %629 = vmatpush.msra.mxu0 %v290
  %630 = vmatpush.msra.mxu0 %v289
  %631 = vmatpush.msra.mxu0 %v288
  %632 = vmatpush.msra.mxu0 %v287
  %633 = vmatpush.msra.mxu0 %v286
  %634 = vmatpush.msra.mxu0 %v285
  %635 = vmatpush.msra.mxu0 %v284
  %636 = vmatpush.msra.mxu0 %v283
  %637 = vmatpush.msra.mxu0 %v282
  %638 = vmatpush.msra.mxu0 %v281
  %639 = vmatpush.msra.mxu0 %v280
  %640 = vmatpush.msra.mxu0 %v279
  %641 = vmatpush.msra.mxu0 %v278
  %642 = vmatpush.msra.mxu0 %v277
  %643 = vmatpush.msra.mxu0 %v276
  %644 = vmatmul.f32.gmra.mxu0 %v20
  %v645 = vpop.f32.mrf.mxu0
  %v646 = vadd.f32 %v551, %v645
  %647 = vmatmul.f32.gmra.mxu0 %v36
  %v648 = vpop.f32.mrf.mxu0
  %v649 = vadd.f32 %v556, %v648
  %650 = vmatmul.f32.gmra.mxu0 %v52
  %v651 = vpop.f32.mrf.mxu0
  %v652 = vadd.f32 %v561, %v651
  %653 = vmatmul.f32.gmra.mxu0 %v68
  %v654 = vpop.f32.mrf.mxu0
  %v655 = vadd.f32 %v566, %v654
  %656 = vmatmul.f32.gmra.mxu0 %v84
  %v657 = vpop.f32.mrf.mxu0
  %v658 = vadd.f32 %v571, %v657
  %659 = vmatmul.f32.gmra.mxu0 %v100
  %v660 = vpop.f32.mrf.mxu0
  %v661 = vadd.f32 %v576, %v660
  %662 = vmatmul.f32.gmra.mxu0 %v116
  %v663 = vpop.f32.mrf.mxu0
  %v664 = vadd.f32 %v581, %v663
  %665 = vmatmul.f32.gmra.mxu0 %v132
  %v666 = vpop.f32.mrf.mxu0
  %v667 = vadd.f32 %v586, %v666
  %668 = vmatmul.f32.gmra.mxu0 %v148
  %v669 = vpop.f32.mrf.mxu0
  %v670 = vadd.f32 %v591, %v669
  %671 = vmatmul.f32.gmra.mxu0 %v164
  %v672 = vpop.f32.mrf.mxu0
  %v673 = vadd.f32 %v596, %v672
  %674 = vmatmul.f32.gmra.mxu0 %v180
  %v675 = vpop.f32.mrf.mxu0
  %v676 = vadd.f32 %v601, %v675
  %677 = vmatmul.f32.gmra.mxu0 %v196
  %v678 = vpop.f32.mrf.mxu0
  %v679 = vadd.f32 %v606, %v678
  %680 = vmatmul.f32.gmra.mxu0 %v212
  %v681 = vpop.f32.mrf.mxu0
  %v682 = vadd.f32 %v611, %v681
  %683 = vmatmul.f32.gmra.mxu0 %v228
  %v684 = vpop.f32.mrf.mxu0
  %v685 = vadd.f32 %v616, %v684
  %686 = vmatmul.f32.gmra.mxu0 %v244
  %v687 = vpop.f32.mrf.mxu0
  %v688 = vadd.f32 %v621, %v687
  %689 = vmatmul.f32.gmra.mxu0 %v260
  %v690 = vpop.f32.mrf.mxu0
  %v691 = vadd.f32 %v626, %v690
  %692 = vdwg.mxu0
  %693 = vmatpush.msra.mxu0 %v307
  %694 = vmatpush.msra.mxu0 %v306
  %695 = vmatpush.msra.mxu0 %v305
  %696 = vmatpush.msra.mxu0 %v304
  %697 = vmatpush.msra.mxu0 %v303
  %698 = vmatpush.msra.mxu0 %v302
  %699 = vmatpush.msra.mxu0 %v301
  %700 = vmatpush.msra.mxu0 %v300
  %701 = vmatpush.msra.mxu0 %v299
  %702 = vmatpush.msra.mxu0 %v298
  %703 = vmatpush.msra.mxu0 %v297
  %704 = vmatpush.msra.mxu0 %v296
  %705 = vmatpush.msra.mxu0 %v295
  %706 = vmatpush.msra.mxu0 %v294
  %707 = vmatpush.msra.mxu0 %v293
  %708 = vmatpush.msra.mxu0 %v292
  %709 = vmatmul.f32.gmra.mxu0 %v21
  %v710 = vpop.f32.mrf.mxu0
  %v711 = vadd.f32 %v646, %v710
  %712 = vmatmul.f32.gmra.mxu0 %v37
  %v713 = vpop.f32.mrf.mxu0
  %v714 = vadd.f32 %v649, %v713
  %715 = vmatmul.f32.gmra.mxu0 %v53
  %v716 = vpop.f32.mrf.mxu0
  %v717 = vadd.f32 %v652, %v716
  %718 = vmatmul.f32.gmra.mxu0 %v69
  %v719 = vpop.f32.mrf.mxu0
  %v720 = vadd.f32 %v655, %v719
  %721 = vmatmul.f32.gmra.mxu0 %v85
  %v722 = vpop.f32.mrf.mxu0
  %v723 = vadd.f32 %v658, %v722
  %724 = vmatmul.f32.gmra.mxu0 %v101
  %v725 = vpop.f32.mrf.mxu0
  %v726 = vadd.f32 %v661, %v725
  %727 = vmatmul.f32.gmra.mxu0 %v117
  %v728 = vpop.f32.mrf.mxu0
  %v729 = vadd.f32 %v664, %v728
  %730 = vmatmul.f32.gmra.mxu0 %v133
  %v731 = vpop.f32.mrf.mxu0
  %v732 = vadd.f32 %v667, %v731
  %733 = vmatmul.f32.gmra.mxu0 %v149
  %v734 = vpop.f32.mrf.mxu0
  %v735 = vadd.f32 %v670, %v734
  %736 = vmatmul.f32.gmra.mxu0 %v165
  %v737 = vpop.f32.mrf.mxu0
  %v738 = vadd.f32 %v673, %v737
  %739 = vmatmul.f32.gmra.mxu0 %v181
  %v740 = vpop.f32.mrf.mxu0
  %v741 = vadd.f32 %v676, %v740
  %742 = vmatmul.f32.gmra.mxu0 %v197
  %v743 = vpop.f32.mrf.mxu0
  %v744 = vadd.f32 %v679, %v743
  %745 = vmatmul.f32.gmra.mxu0 %v213
  %v746 = vpop.f32.mrf.mxu0
  %v747 = vadd.f32 %v682, %v746
  %748 = vmatmul.f32.gmra.mxu0 %v229
  %v749 = vpop.f32.mrf.mxu0
  %v750 = vadd.f32 %v685, %v749
  %751 = vmatmul.f32.gmra.mxu0 %v245
  %v752 = vpop.f32.mrf.mxu0
  %v753 = vadd.f32 %v688, %v752
  %754 = vmatmul.f32.gmra.mxu0 %v261
  %v755 = vpop.f32.mrf.mxu0
  %v756 = vadd.f32 %v691, %v755
  %757 = vdwg.mxu0
  %758 = vmatpush.msra.mxu0 %v323
  %759 = vmatpush.msra.mxu0 %v322
  %760 = vmatpush.msra.mxu0 %v321
  %761 = vmatpush.msra.mxu0 %v320
  %762 = vmatpush.msra.mxu0 %v319
  %763 = vmatpush.msra.mxu0 %v318
  %764 = vmatpush.msra.mxu0 %v317
  %765 = vmatpush.msra.mxu0 %v316
  %766 = vmatpush.msra.mxu0 %v315
  %767 = vmatpush.msra.mxu0 %v314
  %768 = vmatpush.msra.mxu0 %v313
  %769 = vmatpush.msra.mxu0 %v312
  %770 = vmatpush.msra.mxu0 %v311
  %771 = vmatpush.msra.mxu0 %v310
  %772 = vmatpush.msra.mxu0 %v309
  %773 = vmatpush.msra.mxu0 %v308
  %774 = vmatmul.f32.gmra.mxu0 %v22
  %v775 = vpop.f32.mrf.mxu0
  %v776 = vadd.f32 %v711, %v775
  %777 = vmatmul.f32.gmra.mxu0 %v38
  %v778 = vpop.f32.mrf.mxu0
  %v779 = vadd.f32 %v714, %v778
  %780 = vmatmul.f32.gmra.mxu0 %v54
  %v781 = vpop.f32.mrf.mxu0
  %v782 = vadd.f32 %v717, %v781
  %783 = vmatmul.f32.gmra.mxu0 %v70
  %v784 = vpop.f32.mrf.mxu0
  %v785 = vadd.f32 %v720, %v784
  %786 = vmatmul.f32.gmra.mxu0 %v86
  %v787 = vpop.f32.mrf.mxu0
  %v788 = vadd.f32 %v723, %v787
  %789 = vmatmul.f32.gmra.mxu0 %v102
  %v790 = vpop.f32.mrf.mxu0
  %v791 = vadd.f32 %v726, %v790
  %792 = vmatmul.f32.gmra.mxu0 %v118
  %v793 = vpop.f32.mrf.mxu0
  %v794 = vadd.f32 %v729, %v793
  %795 = vmatmul.f32.gmra.mxu0 %v134
  %v796 = vpop.f32.mrf.mxu0
  %v797 = vadd.f32 %v732, %v796
  %798 = vmatmul.f32.gmra.mxu0 %v150
  %v799 = vpop.f32.mrf.mxu0
  %v800 = vadd.f32 %v735, %v799
  %801 = vmatmul.f32.gmra.mxu0 %v166
  %v802 = vpop.f32.mrf.mxu0
  %v803 = vadd.f32 %v738, %v802
  %804 = vmatmul.f32.gmra.mxu0 %v182
  %v805 = vpop.f32.mrf.mxu0
  %v806 = vadd.f32 %v741, %v805
  %807 = vmatmul.f32.gmra.mxu0 %v198
  %v808 = vpop.f32.mrf.mxu0
  %v809 = vadd.f32 %v744, %v808
  %810 = vmatmul.f32.gmra.mxu0 %v214
  %v811 = vpop.f32.mrf.mxu0
  %v812 = vadd.f32 %v747, %v811
  %813 = vmatmul.f32.gmra.mxu0 %v230
  %v814 = vpop.f32.mrf.mxu0
  %v815 = vadd.f32 %v750, %v814
  %816 = vmatmul.f32.gmra.mxu0 %v246
  %v817 = vpop.f32.mrf.mxu0
  %v818 = vadd.f32 %v753, %v817
  %819 = vmatmul.f32.gmra.mxu0 %v262
  %v820 = vpop.f32.mrf.mxu0
  %v821 = vadd.f32 %v756, %v820
  %822 = vdwg.mxu0
  %823 = vmatpush.msra.mxu0 %v339
  %824 = vmatpush.msra.mxu0 %v338
  %825 = vmatpush.msra.mxu0 %v337
  %826 = vmatpush.msra.mxu0 %v336
  %827 = vmatpush.msra.mxu0 %v335
  %828 = vmatpush.msra.mxu0 %v334
  %829 = vmatpush.msra.mxu0 %v333
  %830 = vmatpush.msra.mxu0 %v332
  %831 = vmatpush.msra.mxu0 %v331
  %832 = vmatpush.msra.mxu0 %v330
  %833 = vmatpush.msra.mxu0 %v329
  %834 = vmatpush.msra.mxu0 %v328
  %835 = vmatpush.msra.mxu0 %v327
  %836 = vmatpush.msra.mxu0 %v326
  %837 = vmatpush.msra.mxu0 %v325
  %838 = vmatpush.msra.mxu0 %v324
  %839 = vmatmul.f32.gmra.mxu0 %v23
  %v840 = vpop.f32.mrf.mxu0
  %v841 = vadd.f32 %v776, %v840
  %842 = vmatmul.f32.gmra.mxu0 %v39
  %v843 = vpop.f32.mrf.mxu0
  %v844 = vadd.f32 %v779, %v843
  %845 = vmatmul.f32.gmra.mxu0 %v55
  %v846 = vpop.f32.mrf.mxu0
  %v847 = vadd.f32 %v782, %v846
  %848 = vmatmul.f32.gmra.mxu0 %v71
  %v849 = vpop.f32.mrf.mxu0
  %v850 = vadd.f32 %v785, %v849
  %851 = vmatmul.f32.gmra.mxu0 %v87
  %v852 = vpop.f32.mrf.mxu0
  %v853 = vadd.f32 %v788, %v852
  %854 = vmatmul.f32.gmra.mxu0 %v103
  %v855 = vpop.f32.mrf.mxu0
  %v856 = vadd.f32 %v791, %v855
  %857 = vmatmul.f32.gmra.mxu0 %v119
  %v858 = vpop.f32.mrf.mxu0
  %v859 = vadd.f32 %v794, %v858
  %860 = vmatmul.f32.gmra.mxu0 %v135
  %v861 = vpop.f32.mrf.mxu0
  %v862 = vadd.f32 %v797, %v861
  %863 = vmatmul.f32.gmra.mxu0 %v151
  %v864 = vpop.f32.mrf.mxu0
  %v865 = vadd.f32 %v800, %v864
  %866 = vmatmul.f32.gmra.mxu0 %v167
  %v867 = vpop.f32.mrf.mxu0
  %v868 = vadd.f32 %v803, %v867
  %869 = vmatmul.f32.gmra.mxu0 %v183
  %v870 = vpop.f32.mrf.mxu0
  %v871 = vadd.f32 %v806, %v870
  %872 = vmatmul.f32.gmra.mxu0 %v199
  %v873 = vpop.f32.mrf.mxu0
  %v874 = vadd.f32 %v809, %v873
  %875 = vmatmul.f32.gmra.mxu0 %v215
  %v876 = vpop.f32.mrf.mxu0
  %v877 = vadd.f32 %v812, %v876
  %878 = vmatmul.f32.gmra.mxu0 %v231
  %v879 = vpop.f32.mrf.mxu0
  %v880 = vadd.f32 %v815, %v879
  %881 = vmatmul.f32.gmra.mxu0 %v247
  %v882 = vpop.f32.mrf.mxu0
  %v883 = vadd.f32 %v818, %v882
  %884 = vmatmul.f32.gmra.mxu0 %v263
  %v885 = vpop.f32.mrf.mxu0
  %v886 = vadd.f32 %v821, %v885
  %887 = vdwg.mxu0
  %888 = vmatpush.msra.mxu0 %v355
  %889 = vmatpush.msra.mxu0 %v354
  %890 = vmatpush.msra.mxu0 %v353
  %891 = vmatpush.msra.mxu0 %v352
  %892 = vmatpush.msra.mxu0 %v351
  %893 = vmatpush.msra.mxu0 %v350
  %894 = vmatpush.msra.mxu0 %v349
  %895 = vmatpush.msra.mxu0 %v348
  %896 = vmatpush.msra.mxu0 %v347
  %897 = vmatpush.msra.mxu0 %v346
  %898 = vmatpush.msra.mxu0 %v345
  %899 = vmatpush.msra.mxu0 %v344
  %900 = vmatpush.msra.mxu0 %v343
  %901 = vmatpush.msra.mxu0 %v342
  %902 = vmatpush.msra.mxu0 %v341
  %903 = vmatpush.msra.mxu0 %v340
  %904 = vmatmul.f32.gmra.mxu0 %v24
  %v905 = vpop.f32.mrf.mxu0
  %v906 = vadd.f32 %v841, %v905
  %907 = vmatmul.f32.gmra.mxu0 %v40
  %v908 = vpop.f32.mrf.mxu0
  %v909 = vadd.f32 %v844, %v908
  %910 = vmatmul.f32.gmra.mxu0 %v56
  %v911 = vpop.f32.mrf.mxu0
  %v912 = vadd.f32 %v847, %v911
  %913 = vmatmul.f32.gmra.mxu0 %v72
  %v914 = vpop.f32.mrf.mxu0
  %v915 = vadd.f32 %v850, %v914
  %916 = vmatmul.f32.gmra.mxu0 %v88
  %v917 = vpop.f32.mrf.mxu0
  %v918 = vadd.f32 %v853, %v917
  %919 = vmatmul.f32.gmra.mxu0 %v104
  %v920 = vpop.f32.mrf.mxu0
  %v921 = vadd.f32 %v856, %v920
  %922 = vmatmul.f32.gmra.mxu0 %v120
  %v923 = vpop.f32.mrf.mxu0
  %v924 = vadd.f32 %v859, %v923
  %925 = vmatmul.f32.gmra.mxu0 %v136
  %v926 = vpop.f32.mrf.mxu0
  %v927 = vadd.f32 %v862, %v926
  %928 = vmatmul.f32.gmra.mxu0 %v152
  %v929 = vpop.f32.mrf.mxu0
  %v930 = vadd.f32 %v865, %v929
  %931 = vmatmul.f32.gmra.mxu0 %v168
  %v932 = vpop.f32.mrf.mxu0
  %v933 = vadd.f32 %v868, %v932
  %934 = vmatmul.f32.gmra.mxu0 %v184
  %v935 = vpop.f32.mrf.mxu0
  %v936 = vadd.f32 %v871, %v935
  %937 = vmatmul.f32.gmra.mxu0 %v200
  %v938 = vpop.f32.mrf.mxu0
  %v939 = vadd.f32 %v874, %v938
  %940 = vmatmul.f32.gmra.mxu0 %v216
  %v941 = vpop.f32.mrf.mxu0
  %v942 = vadd.f32 %v877, %v941
  %943 = vmatmul.f32.gmra.mxu0 %v232
  %v944 = vpop.f32.mrf.mxu0
  %v945 = vadd.f32 %v880, %v944
  %946 = vmatmul.f32.gmra.mxu0 %v248
  %v947 = vpop.f32.mrf.mxu0
  %v948 = vadd.f32 %v883, %v947
  %949 = vmatmul.f32.gmra.mxu0 %v264
  %v950 = vpop.f32.mrf.mxu0
  %v951 = vadd.f32 %v886, %v950
  %952 = vdwg.mxu0
  %953 = vmatpush.msra.mxu0 %v371
  %954 = vmatpush.msra.mxu0 %v370
  %955 = vmatpush.msra.mxu0 %v369
  %956 = vmatpush.msra.mxu0 %v368
  %957 = vmatpush.msra.mxu0 %v367
  %958 = vmatpush.msra.mxu0 %v366
  %959 = vmatpush.msra.mxu0 %v365
  %960 = vmatpush.msra.mxu0 %v364
  %961 = vmatpush.msra.mxu0 %v363
  %962 = vmatpush.msra.mxu0 %v362
  %963 = vmatpush.msra.mxu0 %v361
  %964 = vmatpush.msra.mxu0 %v360
  %965 = vmatpush.msra.mxu0 %v359
  %966 = vmatpush.msra.mxu0 %v358
  %967 = vmatpush.msra.mxu0 %v357
  %968 = vmatpush.msra.mxu0 %v356
  %969 = vmatmul.f32.gmra.mxu0 %v25
  %v970 = vpop.f32.mrf.mxu0
  %v971 = vadd.f32 %v906, %v970
  %972 = vmatmul.f32.gmra.mxu0 %v41
  %v973 = vpop.f32.mrf.mxu0
  %v974 = vadd.f32 %v909, %v973
  %975 = vmatmul.f32.gmra.mxu0 %v57
  %v976 = vpop.f32.mrf.mxu0
  %v977 = vadd.f32 %v912, %v976
  %978 = vmatmul.f32.gmra.mxu0 %v73
  %v979 = vpop.f32.mrf.mxu0
  %v980 = vadd.f32 %v915, %v979
  %981 = vmatmul.f32.gmra.mxu0 %v89
  %v982 = vpop.f32.mrf.mxu0
  %v983 = vadd.f32 %v918, %v982
  %984 = vmatmul.f32.gmra.mxu0 %v105
  %v985 = vpop.f32.mrf.mxu0
  %v986 = vadd.f32 %v921, %v985
  %987 = vmatmul.f32.gmra.mxu0 %v121
  %v988 = vpop.f32.mrf.mxu0
  %v989 = vadd.f32 %v924, %v988
  %990 = vmatmul.f32.gmra.mxu0 %v137
  %v991 = vpop.f32.mrf.mxu0
  %v992 = vadd.f32 %v927, %v991
  %993 = vmatmul.f32.gmra.mxu0 %v153
  %v994 = vpop.f32.mrf.mxu0
  %v995 = vadd.f32 %v930, %v994
  %996 = vmatmul.f32.gmra.mxu0 %v169
  %v997 = vpop.f32.mrf.mxu0
  %v998 = vadd.f32 %v933, %v997
  %999 = vmatmul.f32.gmra.mxu0 %v185
  %v1000 = vpop.f32.mrf.mxu0
  %v1001 = vadd.f32 %v936, %v1000
  %1002 = vmatmul.f32.gmra.mxu0 %v201
  %v1003 = vpop.f32.mrf.mxu0
  %v1004 = vadd.f32 %v939, %v1003
  %1005 = vmatmul.f32.gmra.mxu0 %v217
  %v1006 = vpop.f32.mrf.mxu0
  %v1007 = vadd.f32 %v942, %v1006
  %1008 = vmatmul.f32.gmra.mxu0 %v233
  %v1009 = vpop.f32.mrf.mxu0
  %v1010 = vadd.f32 %v945, %v1009
  %1011 = vmatmul.f32.gmra.mxu0 %v249
  %v1012 = vpop.f32.mrf.mxu0
  %v1013 = vadd.f32 %v948, %v1012
  %1014 = vmatmul.f32.gmra.mxu0 %v265
  %v1015 = vpop.f32.mrf.mxu0
  %v1016 = vadd.f32 %v951, %v1015
  %1017 = vdwg.mxu0
  %1018 = vmatpush.msra.mxu0 %v387
  %1019 = vmatpush.msra.mxu0 %v386
  %1020 = vmatpush.msra.mxu0 %v385
  %1021 = vmatpush.msra.mxu0 %v384
  %1022 = vmatpush.msra.mxu0 %v383
  %1023 = vmatpush.msra.mxu0 %v382
  %1024 = vmatpush.msra.mxu0 %v381
  %1025 = vmatpush.msra.mxu0 %v380
  %1026 = vmatpush.msra.mxu0 %v379
  %1027 = vmatpush.msra.mxu0 %v378
  %1028 = vmatpush.msra.mxu0 %v377
  %1029 = vmatpush.msra.mxu0 %v376
  %1030 = vmatpush.msra.mxu0 %v375
  %1031 = vmatpush.msra.mxu0 %v374
  %1032 = vmatpush.msra.mxu0 %v373
  %1033 = vmatpush.msra.mxu0 %v372
  %1034 = vmatmul.f32.gmra.mxu0 %v26
  %v1035 = vpop.f32.mrf.mxu0
  %v1036 = vadd.f32 %v971, %v1035
  %1037 = vmatmul.f32.gmra.mxu0 %v42
  %v1038 = vpop.f32.mrf.mxu0
  %v1039 = vadd.f32 %v974, %v1038
  %1040 = vmatmul.f32.gmra.mxu0 %v58
  %v1041 = vpop.f32.mrf.mxu0
  %v1042 = vadd.f32 %v977, %v1041
  %1043 = vmatmul.f32.gmra.mxu0 %v74
  %v1044 = vpop.f32.mrf.mxu0
  %v1045 = vadd.f32 %v980, %v1044
  %1046 = vmatmul.f32.gmra.mxu0 %v90
  %v1047 = vpop.f32.mrf.mxu0
  %v1048 = vadd.f32 %v983, %v1047
  %1049 = vmatmul.f32.gmra.mxu0 %v106
  %v1050 = vpop.f32.mrf.mxu0
  %v1051 = vadd.f32 %v986, %v1050
  %1052 = vmatmul.f32.gmra.mxu0 %v122
  %v1053 = vpop.f32.mrf.mxu0
  %v1054 = vadd.f32 %v989, %v1053
  %1055 = vmatmul.f32.gmra.mxu0 %v138
  %v1056 = vpop.f32.mrf.mxu0
  %v1057 = vadd.f32 %v992, %v1056
  %1058 = vmatmul.f32.gmra.mxu0 %v154
  %v1059 = vpop.f32.mrf.mxu0
  %v1060 = vadd.f32 %v995, %v1059
  %1061 = vmatmul.f32.gmra.mxu0 %v170
  %v1062 = vpop.f32.mrf.mxu0
  %v1063 = vadd.f32 %v998, %v1062
  %1064 = vmatmul.f32.gmra.mxu0 %v186
  %v1065 = vpop.f32.mrf.mxu0
  %v1066 = vadd.f32 %v1001, %v1065
  %1067 = vmatmul.f32.gmra.mxu0 %v202
  %v1068 = vpop.f32.mrf.mxu0
  %v1069 = vadd.f32 %v1004, %v1068
  %1070 = vmatmul.f32.gmra.mxu0 %v218
  %v1071 = vpop.f32.mrf.mxu0
  %v1072 = vadd.f32 %v1007, %v1071
  %1073 = vmatmul.f32.gmra.mxu0 %v234
  %v1074 = vpop.f32.mrf.mxu0
  %v1075 = vadd.f32 %v1010, %v1074
  %1076 = vmatmul.f32.gmra.mxu0 %v250
  %v1077 = vpop.f32.mrf.mxu0
  %v1078 = vadd.f32 %v1013, %v1077
  %1079 = vmatmul.f32.gmra.mxu0 %v266
  %v1080 = vpop.f32.mrf.mxu0
  %v1081 = vadd.f32 %v1016, %v1080
  %1082 = vdwg.mxu0
  %1083 = vmatpush.msra.mxu0 %v403
  %1084 = vmatpush.msra.mxu0 %v402
  %1085 = vmatpush.msra.mxu0 %v401
  %1086 = vmatpush.msra.mxu0 %v400
  %1087 = vmatpush.msra.mxu0 %v399
  %1088 = vmatpush.msra.mxu0 %v398
  %1089 = vmatpush.msra.mxu0 %v397
  %1090 = vmatpush.msra.mxu0 %v396
  %1091 = vmatpush.msra.mxu0 %v395
  %1092 = vmatpush.msra.mxu0 %v394
  %1093 = vmatpush.msra.mxu0 %v393
  %1094 = vmatpush.msra.mxu0 %v392
  %1095 = vmatpush.msra.mxu0 %v391
  %1096 = vmatpush.msra.mxu0 %v390
  %1097 = vmatpush.msra.mxu0 %v389
  %1098 = vmatpush.msra.mxu0 %v388
  %1099 = vmatmul.f32.gmra.mxu0 %v27
  %v1100 = vpop.f32.mrf.mxu0
  %v1101 = vadd.f32 %v1036, %v1100
  %1102 = vmatmul.f32.gmra.mxu0 %v43
  %v1103 = vpop.f32.mrf.mxu0
  %v1104 = vadd.f32 %v1039, %v1103
  %1105 = vmatmul.f32.gmra.mxu0 %v59
  %v1106 = vpop.f32.mrf.mxu0
  %v1107 = vadd.f32 %v1042, %v1106
  %1108 = vmatmul.f32.gmra.mxu0 %v75
  %v1109 = vpop.f32.mrf.mxu0
  %v1110 = vadd.f32 %v1045, %v1109
  %1111 = vmatmul.f32.gmra.mxu0 %v91
  %v1112 = vpop.f32.mrf.mxu0
  %v1113 = vadd.f32 %v1048, %v1112
  %1114 = vmatmul.f32.gmra.mxu0 %v107
  %v1115 = vpop.f32.mrf.mxu0
  %v1116 = vadd.f32 %v1051, %v1115
  %1117 = vmatmul.f32.gmra.mxu0 %v123
  %v1118 = vpop.f32.mrf.mxu0
  %v1119 = vadd.f32 %v1054, %v1118
  %1120 = vmatmul.f32.gmra.mxu0 %v139
  %v1121 = vpop.f32.mrf.mxu0
  %v1122 = vadd.f32 %v1057, %v1121
  %1123 = vmatmul.f32.gmra.mxu0 %v155
  %v1124 = vpop.f32.mrf.mxu0
  %v1125 = vadd.f32 %v1060, %v1124
  %1126 = vmatmul.f32.gmra.mxu0 %v171
  %v1127 = vpop.f32.mrf.mxu0
  %v1128 = vadd.f32 %v1063, %v1127
  %1129 = vmatmul.f32.gmra.mxu0 %v187
  %v1130 = vpop.f32.mrf.mxu0
  %v1131 = vadd.f32 %v1066, %v1130
  %1132 = vmatmul.f32.gmra.mxu0 %v203
  %v1133 = vpop.f32.mrf.mxu0
  %v1134 = vadd.f32 %v1069, %v1133
  %1135 = vmatmul.f32.gmra.mxu0 %v219
  %v1136 = vpop.f32.mrf.mxu0
  %v1137 = vadd.f32 %v1072, %v1136
  %1138 = vmatmul.f32.gmra.mxu0 %v235
  %v1139 = vpop.f32.mrf.mxu0
  %v1140 = vadd.f32 %v1075, %v1139
  %1141 = vmatmul.f32.gmra.mxu0 %v251
  %v1142 = vpop.f32.mrf.mxu0
  %v1143 = vadd.f32 %v1078, %v1142
  %1144 = vmatmul.f32.gmra.mxu0 %v267
  %v1145 = vpop.f32.mrf.mxu0
  %v1146 = vadd.f32 %v1081, %v1145
  %1147 = vdwg.mxu0
  %1148 = vmatpush.msra.mxu0 %v419
  %1149 = vmatpush.msra.mxu0 %v418
  %1150 = vmatpush.msra.mxu0 %v417
  %1151 = vmatpush.msra.mxu0 %v416
  %1152 = vmatpush.msra.mxu0 %v415
  %1153 = vmatpush.msra.mxu0 %v414
  %1154 = vmatpush.msra.mxu0 %v413
  %1155 = vmatpush.msra.mxu0 %v412
  %1156 = vmatpush.msra.mxu0 %v411
  %1157 = vmatpush.msra.mxu0 %v410
  %1158 = vmatpush.msra.mxu0 %v409
  %1159 = vmatpush.msra.mxu0 %v408
  %1160 = vmatpush.msra.mxu0 %v407
  %1161 = vmatpush.msra.mxu0 %v406
  %1162 = vmatpush.msra.mxu0 %v405
  %1163 = vmatpush.msra.mxu0 %v404
  %1164 = vmatmul.f32.gmra.mxu0 %v28
  %v1165 = vpop.f32.mrf.mxu0
  %v1166 = vadd.f32 %v1101, %v1165
  %1167 = vmatmul.f32.gmra.mxu0 %v44
  %v1168 = vpop.f32.mrf.mxu0
  %v1169 = vadd.f32 %v1104, %v1168
  %1170 = vmatmul.f32.gmra.mxu0 %v60
  %v1171 = vpop.f32.mrf.mxu0
  %v1172 = vadd.f32 %v1107, %v1171
  %1173 = vmatmul.f32.gmra.mxu0 %v76
  %v1174 = vpop.f32.mrf.mxu0
  %v1175 = vadd.f32 %v1110, %v1174
  %1176 = vmatmul.f32.gmra.mxu0 %v92
  %v1177 = vpop.f32.mrf.mxu0
  %v1178 = vadd.f32 %v1113, %v1177
  %1179 = vmatmul.f32.gmra.mxu0 %v108
  %v1180 = vpop.f32.mrf.mxu0
  %v1181 = vadd.f32 %v1116, %v1180
  %1182 = vmatmul.f32.gmra.mxu0 %v124
  %v1183 = vpop.f32.mrf.mxu0
  %v1184 = vadd.f32 %v1119, %v1183
  %1185 = vmatmul.f32.gmra.mxu0 %v140
  %v1186 = vpop.f32.mrf.mxu0
  %v1187 = vadd.f32 %v1122, %v1186
  %1188 = vmatmul.f32.gmra.mxu0 %v156
  %v1189 = vpop.f32.mrf.mxu0
  %v1190 = vadd.f32 %v1125, %v1189
  %1191 = vmatmul.f32.gmra.mxu0 %v172
  %v1192 = vpop.f32.mrf.mxu0
  %v1193 = vadd.f32 %v1128, %v1192
  %1194 = vmatmul.f32.gmra.mxu0 %v188
  %v1195 = vpop.f32.mrf.mxu0
  %v1196 = vadd.f32 %v1131, %v1195
  %1197 = vmatmul.f32.gmra.mxu0 %v204
  %v1198 = vpop.f32.mrf.mxu0
  %v1199 = vadd.f32 %v1134, %v1198
  %1200 = vmatmul.f32.gmra.mxu0 %v220
  %v1201 = vpop.f32.mrf.mxu0
  %v1202 = vadd.f32 %v1137, %v1201
  %1203 = vmatmul.f32.gmra.mxu0 %v236
  %v1204 = vpop.f32.mrf.mxu0
  %v1205 = vadd.f32 %v1140, %v1204
  %1206 = vmatmul.f32.gmra.mxu0 %v252
  %v1207 = vpop.f32.mrf.mxu0
  %v1208 = vadd.f32 %v1143, %v1207
  %1209 = vmatmul.f32.gmra.mxu0 %v268
  %v1210 = vpop.f32.mrf.mxu0
  %v1211 = vadd.f32 %v1146, %v1210
  %1212 = vdwg.mxu0
  %1213 = vmatpush.msra.mxu0 %v435
  %1214 = vmatpush.msra.mxu0 %v434
  %1215 = vmatpush.msra.mxu0 %v433
  %1216 = vmatpush.msra.mxu0 %v432
  %1217 = vmatpush.msra.mxu0 %v431
  %1218 = vmatpush.msra.mxu0 %v430
  %1219 = vmatpush.msra.mxu0 %v429
  %1220 = vmatpush.msra.mxu0 %v428
  %1221 = vmatpush.msra.mxu0 %v427
  %1222 = vmatpush.msra.mxu0 %v426
  %1223 = vmatpush.msra.mxu0 %v425
  %1224 = vmatpush.msra.mxu0 %v424
  %1225 = vmatpush.msra.mxu0 %v423
  %1226 = vmatpush.msra.mxu0 %v422
  %1227 = vmatpush.msra.mxu0 %v421
  %1228 = vmatpush.msra.mxu0 %v420
  %1229 = vmatmul.f32.gmra.mxu0 %v29
  %v1230 = vpop.f32.mrf.mxu0
  %v1231 = vadd.f32 %v1166, %v1230
  %1232 = vmatmul.f32.gmra.mxu0 %v45
  %v1233 = vpop.f32.mrf.mxu0
  %v1234 = vadd.f32 %v1169, %v1233
  %1235 = vmatmul.f32.gmra.mxu0 %v61
  %v1236 = vpop.f32.mrf.mxu0
  %v1237 = vadd.f32 %v1172, %v1236
  %1238 = vmatmul.f32.gmra.mxu0 %v77
  %v1239 = vpop.f32.mrf.mxu0
  %v1240 = vadd.f32 %v1175, %v1239
  %1241 = vmatmul.f32.gmra.mxu0 %v93
  %v1242 = vpop.f32.mrf.mxu0
  %v1243 = vadd.f32 %v1178, %v1242
  %1244 = vmatmul.f32.gmra.mxu0 %v109
  %v1245 = vpop.f32.mrf.mxu0
  %v1246 = vadd.f32 %v1181, %v1245
  %1247 = vmatmul.f32.gmra.mxu0 %v125
  %v1248 = vpop.f32.mrf.mxu0
  %v1249 = vadd.f32 %v1184, %v1248
  %1250 = vmatmul.f32.gmra.mxu0 %v141
  %v1251 = vpop.f32.mrf.mxu0
  %v1252 = vadd.f32 %v1187, %v1251
  %1253 = vmatmul.f32.gmra.mxu0 %v157
  %v1254 = vpop.f32.mrf.mxu0
  %v1255 = vadd.f32 %v1190, %v1254
  %1256 = vmatmul.f32.gmra.mxu0 %v173
  %v1257 = vpop.f32.mrf.mxu0
  %v1258 = vadd.f32 %v1193, %v1257
  %1259 = vmatmul.f32.gmra.mxu0 %v189
  %v1260 = vpop.f32.mrf.mxu0
  %v1261 = vadd.f32 %v1196, %v1260
  %1262 = vmatmul.f32.gmra.mxu0 %v205
  %v1263 = vpop.f32.mrf.mxu0
  %v1264 = vadd.f32 %v1199, %v1263
  %1265 = vmatmul.f32.gmra.mxu0 %v221
  %v1266 = vpop.f32.mrf.mxu0
  %v1267 = vadd.f32 %v1202, %v1266
  %1268 = vmatmul.f32.gmra.mxu0 %v237
  %v1269 = vpop.f32.mrf.mxu0
  %v1270 = vadd.f32 %v1205, %v1269
  %1271 = vmatmul.f32.gmra.mxu0 %v253
  %v1272 = vpop.f32.mrf.mxu0
  %v1273 = vadd.f32 %v1208, %v1272
  %1274 = vmatmul.f32.gmra.mxu0 %v269
  %v1275 = vpop.f32.mrf.mxu0
  %v1276 = vadd.f32 %v1211, %v1275
  %1277 = vdwg.mxu0
  %1278 = vmatpush.msra.mxu0 %v451
  %1279 = vmatpush.msra.mxu0 %v450
  %1280 = vmatpush.msra.mxu0 %v449
  %1281 = vmatpush.msra.mxu0 %v448
  %1282 = vmatpush.msra.mxu0 %v447
  %1283 = vmatpush.msra.mxu0 %v446
  %1284 = vmatpush.msra.mxu0 %v445
  %1285 = vmatpush.msra.mxu0 %v444
  %1286 = vmatpush.msra.mxu0 %v443
  %1287 = vmatpush.msra.mxu0 %v442
  %1288 = vmatpush.msra.mxu0 %v441
  %1289 = vmatpush.msra.mxu0 %v440
  %1290 = vmatpush.msra.mxu0 %v439
  %1291 = vmatpush.msra.mxu0 %v438
  %1292 = vmatpush.msra.mxu0 %v437
  %1293 = vmatpush.msra.mxu0 %v436
  %1294 = vmatmul.f32.gmra.mxu0 %v30
  %v1295 = vpop.f32.mrf.mxu0
  %v1296 = vadd.f32 %v1231, %v1295
  %1297 = vmatmul.f32.gmra.mxu0 %v46
  %v1298 = vpop.f32.mrf.mxu0
  %v1299 = vadd.f32 %v1234, %v1298
  %1300 = vmatmul.f32.gmra.mxu0 %v62
  %v1301 = vpop.f32.mrf.mxu0
  %v1302 = vadd.f32 %v1237, %v1301
  %1303 = vmatmul.f32.gmra.mxu0 %v78
  %v1304 = vpop.f32.mrf.mxu0
  %v1305 = vadd.f32 %v1240, %v1304
  %1306 = vmatmul.f32.gmra.mxu0 %v94
  %v1307 = vpop.f32.mrf.mxu0
  %v1308 = vadd.f32 %v1243, %v1307
  %1309 = vmatmul.f32.gmra.mxu0 %v110
  %v1310 = vpop.f32.mrf.mxu0
  %v1311 = vadd.f32 %v1246, %v1310
  %1312 = vmatmul.f32.gmra.mxu0 %v126
  %v1313 = vpop.f32.mrf.mxu0
  %v1314 = vadd.f32 %v1249, %v1313
  %1315 = vmatmul.f32.gmra.mxu0 %v142
  %v1316 = vpop.f32.mrf.mxu0
  %v1317 = vadd.f32 %v1252, %v1316
  %1318 = vmatmul.f32.gmra.mxu0 %v158
  %v1319 = vpop.f32.mrf.mxu0
  %v1320 = vadd.f32 %v1255, %v1319
  %1321 = vmatmul.f32.gmra.mxu0 %v174
  %v1322 = vpop.f32.mrf.mxu0
  %v1323 = vadd.f32 %v1258, %v1322
  %1324 = vmatmul.f32.gmra.mxu0 %v190
  %v1325 = vpop.f32.mrf.mxu0
  %v1326 = vadd.f32 %v1261, %v1325
  %1327 = vmatmul.f32.gmra.mxu0 %v206
  %v1328 = vpop.f32.mrf.mxu0
  %v1329 = vadd.f32 %v1264, %v1328
  %1330 = vmatmul.f32.gmra.mxu0 %v222
  %v1331 = vpop.f32.mrf.mxu0
  %v1332 = vadd.f32 %v1267, %v1331
  %1333 = vmatmul.f32.gmra.mxu0 %v238
  %v1334 = vpop.f32.mrf.mxu0
  %v1335 = vadd.f32 %v1270, %v1334
  %1336 = vmatmul.f32.gmra.mxu0 %v254
  %v1337 = vpop.f32.mrf.mxu0
  %v1338 = vadd.f32 %v1273, %v1337
  %1339 = vmatmul.f32.gmra.mxu0 %v270
  %v1340 = vpop.f32.mrf.mxu0
  %v1341 = vadd.f32 %v1276, %v1340
  %1342 = vdwg.mxu0
  %1343 = vmatpush.msra.mxu0 %v467
  %1344 = vmatpush.msra.mxu0 %v466
  %1345 = vmatpush.msra.mxu0 %v465
  %1346 = vmatpush.msra.mxu0 %v464
  %1347 = vmatpush.msra.mxu0 %v463
  %1348 = vmatpush.msra.mxu0 %v462
  %1349 = vmatpush.msra.mxu0 %v461
  %1350 = vmatpush.msra.mxu0 %v460
  %1351 = vmatpush.msra.mxu0 %v459
  %1352 = vmatpush.msra.mxu0 %v458
  %1353 = vmatpush.msra.mxu0 %v457
  %1354 = vmatpush.msra.mxu0 %v456
  %1355 = vmatpush.msra.mxu0 %v455
  %1356 = vmatpush.msra.mxu0 %v454
  %1357 = vmatpush.msra.mxu0 %v453
  %1358 = vmatpush.msra.mxu0 %v452
  %1359 = vmatmul.f32.gmra.mxu0 %v31
  %v1360 = vpop.f32.mrf.mxu0
  %v1361 = vadd.f32 %v1296, %v1360
  %1362 = vmatmul.f32.gmra.mxu0 %v47
  %v1363 = vpop.f32.mrf.mxu0
  %v1364 = vadd.f32 %v1299, %v1363
  %1365 = vmatmul.f32.gmra.mxu0 %v63
  %v1366 = vpop.f32.mrf.mxu0
  %v1367 = vadd.f32 %v1302, %v1366
  %1368 = vmatmul.f32.gmra.mxu0 %v79
  %v1369 = vpop.f32.mrf.mxu0
  %v1370 = vadd.f32 %v1305, %v1369
  %1371 = vmatmul.f32.gmra.mxu0 %v95
  %v1372 = vpop.f32.mrf.mxu0
  %v1373 = vadd.f32 %v1308, %v1372
  %1374 = vmatmul.f32.gmra.mxu0 %v111
  %v1375 = vpop.f32.mrf.mxu0
  %v1376 = vadd.f32 %v1311, %v1375
  %1377 = vmatmul.f32.gmra.mxu0 %v127
  %v1378 = vpop.f32.mrf.mxu0
  %v1379 = vadd.f32 %v1314, %v1378
  %1380 = vmatmul.f32.gmra.mxu0 %v143
  %v1381 = vpop.f32.mrf.mxu0
  %v1382 = vadd.f32 %v1317, %v1381
  %1383 = vmatmul.f32.gmra.mxu0 %v159
  %v1384 = vpop.f32.mrf.mxu0
  %v1385 = vadd.f32 %v1320, %v1384
  %1386 = vmatmul.f32.gmra.mxu0 %v175
  %v1387 = vpop.f32.mrf.mxu0
  %v1388 = vadd.f32 %v1323, %v1387
  %1389 = vmatmul.f32.gmra.mxu0 %v191
  %v1390 = vpop.f32.mrf.mxu0
  %v1391 = vadd.f32 %v1326, %v1390
  %1392 = vmatmul.f32.gmra.mxu0 %v207
  %v1393 = vpop.f32.mrf.mxu0
  %v1394 = vadd.f32 %v1329, %v1393
  %1395 = vmatmul.f32.gmra.mxu0 %v223
  %v1396 = vpop.f32.mrf.mxu0
  %v1397 = vadd.f32 %v1332, %v1396
  %1398 = vmatmul.f32.gmra.mxu0 %v239
  %v1399 = vpop.f32.mrf.mxu0
  %v1400 = vadd.f32 %v1335, %v1399
  %1401 = vmatmul.f32.gmra.mxu0 %v255
  %v1402 = vpop.f32.mrf.mxu0
  %v1403 = vadd.f32 %v1338, %v1402
  %1404 = vmatmul.f32.gmra.mxu0 %v271
  %v1405 = vpop.f32.mrf.mxu0
  %v1406 = vadd.f32 %v1341, %v1405
  %1407 = vdwg.mxu0
  %1408 = vmatpush.msra.mxu0 %v483
  %1409 = vmatpush.msra.mxu0 %v482
  %1410 = vmatpush.msra.mxu0 %v481
  %1411 = vmatpush.msra.mxu0 %v480
  %1412 = vmatpush.msra.mxu0 %v479
  %1413 = vmatpush.msra.mxu0 %v478
  %1414 = vmatpush.msra.mxu0 %v477
  %1415 = vmatpush.msra.mxu0 %v476
  %1416 = vmatpush.msra.mxu0 %v475
  %1417 = vmatpush.msra.mxu0 %v474
  %1418 = vmatpush.msra.mxu0 %v473
  %1419 = vmatpush.msra.mxu0 %v472
  %1420 = vmatpush.msra.mxu0 %v471
  %1421 = vmatpush.msra.mxu0 %v470
  %1422 = vmatpush.msra.mxu0 %v469
  %1423 = vmatpush.msra.mxu0 %v468
  %1424 = vmatmul.f32.gmra.mxu0 %v32
  %v1425 = vpop.f32.mrf.mxu0
  %v1426 = vadd.f32 %v1361, %v1425
  %1427 = vmatmul.f32.gmra.mxu0 %v48
  %v1428 = vpop.f32.mrf.mxu0
  %v1429 = vadd.f32 %v1364, %v1428
  %1430 = vmatmul.f32.gmra.mxu0 %v64
  %v1431 = vpop.f32.mrf.mxu0
  %v1432 = vadd.f32 %v1367, %v1431
  %1433 = vmatmul.f32.gmra.mxu0 %v80
  %v1434 = vpop.f32.mrf.mxu0
  %v1435 = vadd.f32 %v1370, %v1434
  %1436 = vmatmul.f32.gmra.mxu0 %v96
  %v1437 = vpop.f32.mrf.mxu0
  %v1438 = vadd.f32 %v1373, %v1437
  %1439 = vmatmul.f32.gmra.mxu0 %v112
  %v1440 = vpop.f32.mrf.mxu0
  %v1441 = vadd.f32 %v1376, %v1440
  %1442 = vmatmul.f32.gmra.mxu0 %v128
  %v1443 = vpop.f32.mrf.mxu0
  %v1444 = vadd.f32 %v1379, %v1443
  %1445 = vmatmul.f32.gmra.mxu0 %v144
  %v1446 = vpop.f32.mrf.mxu0
  %v1447 = vadd.f32 %v1382, %v1446
  %1448 = vmatmul.f32.gmra.mxu0 %v160
  %v1449 = vpop.f32.mrf.mxu0
  %v1450 = vadd.f32 %v1385, %v1449
  %1451 = vmatmul.f32.gmra.mxu0 %v176
  %v1452 = vpop.f32.mrf.mxu0
  %v1453 = vadd.f32 %v1388, %v1452
  %1454 = vmatmul.f32.gmra.mxu0 %v192
  %v1455 = vpop.f32.mrf.mxu0
  %v1456 = vadd.f32 %v1391, %v1455
  %1457 = vmatmul.f32.gmra.mxu0 %v208
  %v1458 = vpop.f32.mrf.mxu0
  %v1459 = vadd.f32 %v1394, %v1458
  %1460 = vmatmul.f32.gmra.mxu0 %v224
  %v1461 = vpop.f32.mrf.mxu0
  %v1462 = vadd.f32 %v1397, %v1461
  %1463 = vmatmul.f32.gmra.mxu0 %v240
  %v1464 = vpop.f32.mrf.mxu0
  %v1465 = vadd.f32 %v1400, %v1464
  %1466 = vmatmul.f32.gmra.mxu0 %v256
  %v1467 = vpop.f32.mrf.mxu0
  %v1468 = vadd.f32 %v1403, %v1467
  %1469 = vmatmul.f32.gmra.mxu0 %v272
  %v1470 = vpop.f32.mrf.mxu0
  %v1471 = vadd.f32 %v1406, %v1470
  %1472 = vdwg.mxu0
  %1473 = vmatpush.msra.mxu0 %v499
  %1474 = vmatpush.msra.mxu0 %v498
  %1475 = vmatpush.msra.mxu0 %v497
  %1476 = vmatpush.msra.mxu0 %v496
  %1477 = vmatpush.msra.mxu0 %v495
  %1478 = vmatpush.msra.mxu0 %v494
  %1479 = vmatpush.msra.mxu0 %v493
  %1480 = vmatpush.msra.mxu0 %v492
  %1481 = vmatpush.msra.mxu0 %v491
  %1482 = vmatpush.msra.mxu0 %v490
  %1483 = vmatpush.msra.mxu0 %v489
  %1484 = vmatpush.msra.mxu0 %v488
  %1485 = vmatpush.msra.mxu0 %v487
  %1486 = vmatpush.msra.mxu0 %v486
  %1487 = vmatpush.msra.mxu0 %v485
  %1488 = vmatpush.msra.mxu0 %v484
  %1489 = vmatmul.f32.gmra.mxu0 %v33
  %v1490 = vpop.f32.mrf.mxu0
  %v1491 = vadd.f32 %v1426, %v1490
  %1492 = vmatmul.f32.gmra.mxu0 %v49
  %v1493 = vpop.f32.mrf.mxu0
  %v1494 = vadd.f32 %v1429, %v1493
  %1495 = vmatmul.f32.gmra.mxu0 %v65
  %v1496 = vpop.f32.mrf.mxu0
  %v1497 = vadd.f32 %v1432, %v1496
  %1498 = vmatmul.f32.gmra.mxu0 %v81
  %v1499 = vpop.f32.mrf.mxu0
  %v1500 = vadd.f32 %v1435, %v1499
  %1501 = vmatmul.f32.gmra.mxu0 %v97
  %v1502 = vpop.f32.mrf.mxu0
  %v1503 = vadd.f32 %v1438, %v1502
  %1504 = vmatmul.f32.gmra.mxu0 %v113
  %v1505 = vpop.f32.mrf.mxu0
  %v1506 = vadd.f32 %v1441, %v1505
  %1507 = vmatmul.f32.gmra.mxu0 %v129
  %v1508 = vpop.f32.mrf.mxu0
  %v1509 = vadd.f32 %v1444, %v1508
  %1510 = vmatmul.f32.gmra.mxu0 %v145
  %v1511 = vpop.f32.mrf.mxu0
  %v1512 = vadd.f32 %v1447, %v1511
  %1513 = vmatmul.f32.gmra.mxu0 %v161
  %v1514 = vpop.f32.mrf.mxu0
  %v1515 = vadd.f32 %v1450, %v1514
  %1516 = vmatmul.f32.gmra.mxu0 %v177
  %v1517 = vpop.f32.mrf.mxu0
  %v1518 = vadd.f32 %v1453, %v1517
  %1519 = vmatmul.f32.gmra.mxu0 %v193
  %v1520 = vpop.f32.mrf.mxu0
  %v1521 = vadd.f32 %v1456, %v1520
  %1522 = vmatmul.f32.gmra.mxu0 %v209
  %v1523 = vpop.f32.mrf.mxu0
  %v1524 = vadd.f32 %v1459, %v1523
  %1525 = vmatmul.f32.gmra.mxu0 %v225
  %v1526 = vpop.f32.mrf.mxu0
  %v1527 = vadd.f32 %v1462, %v1526
  %1528 = vmatmul.f32.gmra.mxu0 %v241
  %v1529 = vpop.f32.mrf.mxu0
  %v1530 = vadd.f32 %v1465, %v1529
  %1531 = vmatmul.f32.gmra.mxu0 %v257
  %v1532 = vpop.f32.mrf.mxu0
  %v1533 = vadd.f32 %v1468, %v1532
  %1534 = vmatmul.f32.gmra.mxu0 %v273
  %v1535 = vpop.f32.mrf.mxu0
  %v1536 = vadd.f32 %v1471, %v1535
  %1537 = vdwg.mxu0
  %1538 = vmatpush.msra.mxu0 %v515
  %1539 = vmatpush.msra.mxu0 %v514
  %1540 = vmatpush.msra.mxu0 %v513
  %1541 = vmatpush.msra.mxu0 %v512
  %1542 = vmatpush.msra.mxu0 %v511
  %1543 = vmatpush.msra.mxu0 %v510
  %1544 = vmatpush.msra.mxu0 %v509
  %1545 = vmatpush.msra.mxu0 %v508
  %1546 = vmatpush.msra.mxu0 %v507
  %1547 = vmatpush.msra.mxu0 %v506
  %1548 = vmatpush.msra.mxu0 %v505
  %1549 = vmatpush.msra.mxu0 %v504
  %1550 = vmatpush.msra.mxu0 %v503
  %1551 = vmatpush.msra.mxu0 %v502
  %1552 = vmatpush.msra.mxu0 %v501
  %1553 = vmatpush.msra.mxu0 %v500
  %1554 = vmatmul.f32.gmra.mxu0 %v34
  %v1555 = vpop.f32.mrf.mxu0
  %v1556 = vadd.f32 %v1491, %v1555
  %1557 = vmatmul.f32.gmra.mxu0 %v50
  %v1558 = vpop.f32.mrf.mxu0
  %v1559 = vadd.f32 %v1494, %v1558
  %1560 = vmatmul.f32.gmra.mxu0 %v66
  %v1561 = vpop.f32.mrf.mxu0
  %v1562 = vadd.f32 %v1497, %v1561
  %1563 = vmatmul.f32.gmra.mxu0 %v82
  %v1564 = vpop.f32.mrf.mxu0
  %v1565 = vadd.f32 %v1500, %v1564
  %1566 = vmatmul.f32.gmra.mxu0 %v98
  %v1567 = vpop.f32.mrf.mxu0
  %v1568 = vadd.f32 %v1503, %v1567
  %1569 = vmatmul.f32.gmra.mxu0 %v114
  %v1570 = vpop.f32.mrf.mxu0
  %v1571 = vadd.f32 %v1506, %v1570
  %1572 = vmatmul.f32.gmra.mxu0 %v130
  %v1573 = vpop.f32.mrf.mxu0
  %v1574 = vadd.f32 %v1509, %v1573
  %1575 = vmatmul.f32.gmra.mxu0 %v146
  %v1576 = vpop.f32.mrf.mxu0
  %v1577 = vadd.f32 %v1512, %v1576
  %1578 = vmatmul.f32.gmra.mxu0 %v162
  %v1579 = vpop.f32.mrf.mxu0
  %v1580 = vadd.f32 %v1515, %v1579
  %1581 = vmatmul.f32.gmra.mxu0 %v178
  %v1582 = vpop.f32.mrf.mxu0
  %v1583 = vadd.f32 %v1518, %v1582
  %1584 = vmatmul.f32.gmra.mxu0 %v194
  %v1585 = vpop.f32.mrf.mxu0
  %v1586 = vadd.f32 %v1521, %v1585
  %1587 = vmatmul.f32.gmra.mxu0 %v210
  %v1588 = vpop.f32.mrf.mxu0
  %v1589 = vadd.f32 %v1524, %v1588
  %1590 = vmatmul.f32.gmra.mxu0 %v226
  %v1591 = vpop.f32.mrf.mxu0
  %v1592 = vadd.f32 %v1527, %v1591
  %1593 = vmatmul.f32.gmra.mxu0 %v242
  %v1594 = vpop.f32.mrf.mxu0
  %v1595 = vadd.f32 %v1530, %v1594
  %1596 = vmatmul.f32.gmra.mxu0 %v258
  %v1597 = vpop.f32.mrf.mxu0
  %v1598 = vadd.f32 %v1533, %v1597
  %1599 = vmatmul.f32.gmra.mxu0 %v274
  %v1600 = vpop.f32.mrf.mxu0
  %v1601 = vadd.f32 %v1536, %v1600
  %1602 = vdwg.mxu0
  %1603 = vmatpush.msra.mxu0 %v531
  %1604 = vmatpush.msra.mxu0 %v530
  %1605 = vmatpush.msra.mxu0 %v529
  %1606 = vmatpush.msra.mxu0 %v528
  %1607 = vmatpush.msra.mxu0 %v527
  %1608 = vmatpush.msra.mxu0 %v526
  %1609 = vmatpush.msra.mxu0 %v525
  %1610 = vmatpush.msra.mxu0 %v524
  %1611 = vmatpush.msra.mxu0 %v523
  %1612 = vmatpush.msra.mxu0 %v522
  %1613 = vmatpush.msra.mxu0 %v521
  %1614 = vmatpush.msra.mxu0 %v520
  %1615 = vmatpush.msra.mxu0 %v519
  %1616 = vmatpush.msra.mxu0 %v518
  %1617 = vmatpush.msra.mxu0 %v517
  %1618 = vmatpush.msra.mxu0 %v516
  %1619 = vmatmul.f32.gmra.mxu0 %v35
  %v1620 = vpop.f32.mrf.mxu0
  %v1621 = vadd.f32 %v1556, %v1620
  %1622 = vmatmul.f32.gmra.mxu0 %v51
  %v1623 = vpop.f32.mrf.mxu0
  %v1624 = vadd.f32 %v1559, %v1623
  %1625 = vmatmul.f32.gmra.mxu0 %v67
  %v1626 = vpop.f32.mrf.mxu0
  %v1627 = vadd.f32 %v1562, %v1626
  %1628 = vmatmul.f32.gmra.mxu0 %v83
  %v1629 = vpop.f32.mrf.mxu0
  %v1630 = vadd.f32 %v1565, %v1629
  %1631 = vmatmul.f32.gmra.mxu0 %v99
  %v1632 = vpop.f32.mrf.mxu0
  %v1633 = vadd.f32 %v1568, %v1632
  %1634 = vmatmul.f32.gmra.mxu0 %v115
  %v1635 = vpop.f32.mrf.mxu0
  %v1636 = vadd.f32 %v1571, %v1635
  %1637 = vmatmul.f32.gmra.mxu0 %v131
  %v1638 = vpop.f32.mrf.mxu0
  %v1639 = vadd.f32 %v1574, %v1638
  %1640 = vmatmul.f32.gmra.mxu0 %v147
  %v1641 = vpop.f32.mrf.mxu0
  %v1642 = vadd.f32 %v1577, %v1641
  %1643 = vmatmul.f32.gmra.mxu0 %v163
  %v1644 = vpop.f32.mrf.mxu0
  %v1645 = vadd.f32 %v1580, %v1644
  %1646 = vmatmul.f32.gmra.mxu0 %v179
  %v1647 = vpop.f32.mrf.mxu0
  %v1648 = vadd.f32 %v1583, %v1647
  %1649 = vmatmul.f32.gmra.mxu0 %v195
  %v1650 = vpop.f32.mrf.mxu0
  %v1651 = vadd.f32 %v1586, %v1650
  %1652 = vmatmul.f32.gmra.mxu0 %v211
  %v1653 = vpop.f32.mrf.mxu0
  %v1654 = vadd.f32 %v1589, %v1653
  %1655 = vmatmul.f32.gmra.mxu0 %v227
  %v1656 = vpop.f32.mrf.mxu0
  %v1657 = vadd.f32 %v1592, %v1656
  %1658 = vmatmul.f32.gmra.mxu0 %v243
  %v1659 = vpop.f32.mrf.mxu0
  %v1660 = vadd.f32 %v1595, %v1659
  %1661 = vmatmul.f32.gmra.mxu0 %v259
  %v1662 = vpop.f32.mrf.mxu0
  %v1663 = vadd.f32 %v1598, %v1662
  %1664 = vmatmul.f32.gmra.mxu0 %v275
  %v1665 = vpop.f32.mrf.mxu0
  %v1666 = vadd.f32 %v1601, %v1665
  %1667 = vdwg.mxu0
  %v1668 = vmul.f32 %v1621, %v1621
  %v1669 = vmul.f32 %v1624, %v1624
  %v1670 = vmul.f32 %v1627, %v1627
  %v1671 = vmul.f32 %v1630, %v1630
  %v1672 = vmul.f32 %v1633, %v1633
  %v1673 = vmul.f32 %v1636, %v1636
  %v1674 = vmul.f32 %v1639, %v1639
  %v1675 = vmul.f32 %v1642, %v1642
  %v1676 = vmul.f32 %v1645, %v1645
  %v1677 = vmul.f32 %v1648, %v1648
  %v1678 = vmul.f32 %v1651, %v1651
  %v1679 = vmul.f32 %v1654, %v1654
  %v1680 = vmul.f32 %v1657, %v1657
  %v1681 = vmul.f32 %v1660, %v1660
  %v1682 = vmul.f32 %v1663, %v1663
  %v1683 = vmul.f32 %v1666, %v1666
  %vm1684 = vcmask 130048
  %v1685 = vsel %vm1684, %v1668, 0.0
  %v1686 = vsel %vm1684, %v1669, 0.0
  %v1687 = vadd.f32 %v1685, %v1686
  %v1688 = vsel %vm1684, %v1670, 0.0
  %v1689 = vadd.f32 %v1687, %v1688
  %v1690 = vsel %vm1684, %v1671, 0.0
  %v1691 = vadd.f32 %v1689, %v1690
  %v1692 = vsel %vm1684, %v1672, 0.0
  %v1693 = vadd.f32 %v1691, %v1692
  %v1694 = vsel %vm1684, %v1673, 0.0
  %v1695 = vadd.f32 %v1693, %v1694
  %v1696 = vsel %vm1684, %v1674, 0.0
  %v1697 = vadd.f32 %v1695, %v1696
  %v1698 = vsel %vm1684, %v1675, 0.0
  %v1699 = vadd.f32 %v1697, %v1698
  %v1700 = vsel %vm1684, %v1676, 0.0
  %v1701 = vadd.f32 %v1699, %v1700
  %v1702 = vsel %vm1684, %v1677, 0.0
  %v1703 = vadd.f32 %v1701, %v1702
  %v1704 = vsel %vm1684, %v1678, 0.0
  %v1705 = vadd.f32 %v1703, %v1704
  %v1706 = vsel %vm1684, %v1679, 0.0
  %v1707 = vadd.f32 %v1705, %v1706
  %v1708 = vsel %vm1684, %v1680, 0.0
  %v1709 = vadd.f32 %v1707, %v1708
  %v1710 = vsel %vm1684, %v1681, 0.0
  %v1711 = vadd.f32 %v1709, %v1710
  %v1712 = vsel %vm1684, %v1682, 0.0
  %v1713 = vadd.f32 %v1711, %v1712
  %v1714 = vsel %vm1684, %v1683, 0.0
  %v1715 = vadd.f32 %v1713, %v1714
  %v1716 = vrot.slane %v1715, 4
  %v1717 = vadd.f32 %v1715, %v1716
  %v1718 = vrot.slane %v1717, 2
  %v1719 = vadd.f32 %v1717, %v1718
  %v1720 = vrot.slane %v1719, 1
  %v1721 = vadd.f32 %v1719, %v1720
  %v1722 = vmax.f32 %v1721, 1e-24
  %v1723 = vrsqrt.pop %v1722
  %v1724 = vmul.f32 %v1723, %v1722
  %v1725 = vmul.f32 %v1724, %v1723
  %v1726 = vmul.f32 0.5, %v1725
  %v1727 = vsub.f32 1.5, %v1726
  %v1728 = vmul.f32 %v1723, %v1727
  %vm1729 = vweird.f32 %v1722
  %vm1730 = vweird.f32 %v1723
  %vm1731 = vmor %vm1729, %vm1730
  %v1732 = vsel %vm1731, %v1723, %v1728
  %v1733 = vmul.f32 %v1621, %v1732
  %v1734 = vmul.f32 %v1624, %v1732
  %v1735 = vmul.f32 %v1627, %v1732
  %v1736 = vmul.f32 %v1630, %v1732
  %v1737 = vmul.f32 %v1633, %v1732
  %v1738 = vmul.f32 %v1636, %v1732
  %v1739 = vmul.f32 %v1639, %v1732
  %v1740 = vmul.f32 %v1642, %v1732
  %v1741 = vmul.f32 %v1645, %v1732
  %v1742 = vmul.f32 %v1648, %v1732
  %v1743 = vmul.f32 %v1651, %v1732
  %v1744 = vmul.f32 %v1654, %v1732
  %v1745 = vmul.f32 %v1657, %v1732
  %v1746 = vmul.f32 %v1660, %v1732
  %v1747 = vmul.f32 %v1663, %v1732
  %v1748 = vmul.f32 %v1666, %v1732
  %v1749 = vld [vmem:[%s3] sm:$0xff]
  %v1750 = vld [vmem:[%s3 + $0x8] sm:$0xff]
  %1751 = vmatpush.msra.mxu0 %v1748
  %1752 = vmatpush.msra.mxu0 %v1747
  %1753 = vmatpush.msra.mxu0 %v1746
  %1754 = vmatpush.msra.mxu0 %v1745
  %1755 = vmatpush.msra.mxu0 %v1744
  %1756 = vmatpush.msra.mxu0 %v1743
  %1757 = vmatpush.msra.mxu0 %v1742
  %1758 = vmatpush.msra.mxu0 %v1741
  %1759 = vmatpush.msra.mxu0 %v1740
  %1760 = vmatpush.msra.mxu0 %v1739
  %1761 = vmatpush.msra.mxu0 %v1738
  %1762 = vmatpush.msra.mxu0 %v1737
  %1763 = vmatpush.msra.mxu0 %v1736
  %1764 = vmatpush.msra.mxu0 %v1735
  %1765 = vmatpush.msra.mxu0 %v1734
  %1766 = vmatpush.msra.mxu0 %v1733
  %1767 = vmatmul.f32.gmra.mxu0 %v1749
  %v1768 = vpop.f32.mrf.mxu0
  %v1769 = vadd.f32 0.0, %v1768
  %1770 = vmatmul.f32.gmra.mxu0 %v1750
  %v1771 = vpop.f32.mrf.mxu0
  %v1772 = vadd.f32 0.0, %v1771
  %1773 = vdwg.mxu0
  %v1774 = vmul.f32 %v1769, 2.0
  %v1775 = vmul.f32 %v1772, 2.0
  %v1776 = vsub.f32 2.0, %v1774
  %v1777 = vsub.f32 2.0, %v1775
  %v1778 = vlaneseq
  %v1779 = vshrl.u32 %v1778, 7
  %v1780 = vadd.s32 %v1779, 8
  %v1781 = vld [vmem:[%s4] sm:$0x1]
  %v1782 = vperm.slane %v1781, 0
  %vm1783 = vcmp.eq.s32.totalorder %v1779, %v1782
  %vm1784 = vcmp.eq.s32.totalorder %v1780, %v1782
  %vm1785 = vcmp.lt.s32.totalorder %v1779, 16
  %vm1786 = vcmp.lt.s32.totalorder %v1780, 16
  %vm1787 = vmxor %vm1783, 1
  %vm1788 = vmxor %vm1784, 1
  %vm1789 = vmand %vm1785, %vm1787
  %vm1790 = vmand %vm1786, %vm1788
  %v1791 = vsel %vm1783, %v1776, 0.0
  %v1792 = vsel %vm1784, %v1777, 0.0
  %v1793 = vsel %vm1684, %v1791, 0.0
  %v1794 = vsel %vm1684, %v1792, 0.0
  %v1795 = vadd.f32 %v1793, %v1794
  %v1796 = vrot.slane %v1795, 4
  %v1797 = vadd.f32 %v1795, %v1796
  %v1798 = vrot.slane %v1797, 2
  %v1799 = vadd.f32 %v1797, %v1798
  %v1800 = vrot.slane %v1799, 1
  %v1801 = vadd.f32 %v1799, %v1800
  %v1802 = vsub.f32 0.0, %v1776
  %v1803 = vsub.f32 0.0, %v1777
  %v1804 = vmul.f32 %v1802, 1.442695
  %v1805 = vpow.pop %v1804
  %v1806 = vmul.f32 %v1803, 1.442695
  %v1807 = vpow.pop %v1806
  %v1808 = vsel %vm1789, %v1805, 0.0
  %v1809 = vsel %vm1790, %v1807, 0.0
  %v1810 = vsel %vm1684, %v1808, 0.0
  %v1811 = vsel %vm1684, %v1809, 0.0
  %v1812 = vadd.f32 %v1810, %v1811
  %v1813 = vrot.slane %v1812, 4
  %v1814 = vadd.f32 %v1812, %v1813
  %v1815 = vrot.slane %v1814, 2
  %v1816 = vadd.f32 %v1814, %v1815
  %v1817 = vrot.slane %v1816, 1
  %v1818 = vadd.f32 %v1816, %v1817
  %v1819 = vlog2.pop %v1818
  %v1820 = vmul.f32 %v1819, 0.6931472
  %v1821 = vadd.f32 %v1801, %v1820
  %vm1822 = vcmask 122880
  %1823 = vst.msk [vmem:[%s5] sm:$0x1] %vm1822, %v1821
  // Predicated region
  $region22: #{proxy_nca_forward.1} parent=0 // pred_check
    _
  $region23: #{proxy_nca_forward.1} parent=0 // pred_check_branch
    %1825 = sbr.rel (0) target = $region25
  $region24: #{proxy_nca_forward.1} parent=0 // pred_region
    _
  $region25: #{proxy_nca_forward.1} parent=0 // pred_fallthru
    _
  // Predicated region
  $region26: #{proxy_nca_forward.1} parent=0 // pred_check
    _
  $region27: #{proxy_nca_forward.1} parent=0 // pred_check_branch
    %1827 = sbr.rel (0) target = $region29
  $region28: #{proxy_nca_forward.1} parent=0 // pred_region
    _
  $region29: #{proxy_nca_forward.1} parent=0 // pred_fallthru
    _

</llo_original>
